<compile_context>
chip_gen: v6e
topology: v6e:2x2x1
jax: 0.10.0
libtpu: 0.0.40
codegen_flags: <defaults>
</compile_context>

<pallas_src>
import jax
import jax.numpy as jnp
from jax import lax
from jax.experimental import pallas as pl
from jax.experimental.pallas import tpu as pltpu

_VMEM_LIMIT = 48 * 1024 * 1024  # scoped-VMEM limit; kernels below use << this


# ----------------------------- Pallas kernels --------------------------------

def _down_gemm_kernel(a_ref, b_ref, o_ref, acc_ref):
    """Tiled GEMM (im2col'd x @ W_down) with fused LeakyReLU(0.2) on the A tile
    and fused ReLU (uprelu) epilogue.  Padded rows/cols of A are zero and stay
    zero through LeakyReLU."""
    @pl.when(pl.program_id(2) == 0)
    def _init():
        acc_ref[...] = jnp.zeros_like(acc_ref)

    a = a_ref[...].astype(jnp.float32)
    a = jnp.where(a >= 0.0, a, 0.2 * a).astype(jnp.bfloat16)   # LeakyReLU(0.2)
    acc_ref[...] += jnp.dot(a, b_ref[...], preferred_element_type=jnp.float32)

    @pl.when(pl.program_id(2) == pl.num_programs(2) - 1)
    def _finalize():
        o_ref[...] = jnp.maximum(acc_ref[...], 0.0).astype(o_ref.dtype)  # uprelu


def _up_gemm_stats_kernel(a_ref, b_ref, o_ref, s_ref, acc_ref):
    """Tiled GEMM for the phase-decomposed ConvTranspose.  Emits bf16 output and
    one merged (1, 2, tn) block of per-column [sum; sum-of-squares] taken from
    the f32 accumulator (fused BatchNorm statistics)."""
    @pl.when(pl.program_id(2) == 0)
    def _init():
        acc_ref[...] = jnp.zeros_like(acc_ref)

    acc_ref[...] += jnp.dot(a_ref[...], b_ref[...],
                            preferred_element_type=jnp.float32)

    @pl.when(pl.program_id(2) == pl.num_programs(2) - 1)
    def _finalize():
        y = acc_ref[...]
        o_ref[...] = y.astype(o_ref.dtype)                     # bf16 output
        s1 = jnp.sum(y, axis=0, keepdims=True)                 # (1, tn) f32
        s2 = jnp.sum(y * y, axis=0, keepdims=True)             # (1, tn) f32
        s_ref[...] = jnp.concatenate([s1, s2], axis=0)[None]   # (1, 2, tn)


def _bn_apply_kernel(y_ref, scale_ref, shift_ref, o_ref):
    """BatchNorm finalize: y * scale + shift (per-column broadcast), bf16 out."""
    y = y_ref[...].astype(jnp.float32)
    o_ref[...] = (y * scale_ref[...] + shift_ref[...]).astype(o_ref.dtype)


# --------------------------- pallas_call wrappers -----------------------------

def _round_up(x, m):
    return ((x + m - 1) // m) * m


def _pad_2d(a, rows, cols):
    return jnp.pad(a, ((0, rows - a.shape[0]), (0, cols - a.shape[1])))


def _pick_tiles(m, k, n, *, tm_max=512, tk_max=512, tn_max=2048):
    """Pad (m, k, n) to lane/sublane-friendly sizes and pick tiles.

    tn covers the whole (padded) N dimension up to tn_max so gn == 1 and the
    patch matrix (A) is not re-read across the j axis; tm/tk grow to 512 where
    the problem allows (per-step VMEM stays well under the scoped limit)."""
    mp, kp, np_ = _round_up(m, 8), _round_up(k, 128), _round_up(n, 128)
    tm, tk, tn = min(tm_max, mp), min(tk_max, kp), min(tn_max, np_)
    mp, kp, np_ = _round_up(mp, tm), _round_up(kp, tk), _round_up(np_, tn)
    return (mp, kp, np_), (tm, tk, tn)


def _tiled_matmul_leakyrelu(a, b, *, tm, tn, tk):
    mp, kp = a.shape
    _, np_ = b.shape
    grid = (mp // tm, np_ // tn, kp // tk)
    return pl.pallas_call(
        _down_gemm_kernel,
        out_shape=jax.ShapeDtypeStruct((mp, np_), jnp.bfloat16),
        grid_spec=pltpu.PrefetchScalarGridSpec(
            num_scalar_prefetch=0,
            grid=grid,
            in_specs=[pl.BlockSpec((tm, tk), lambda i, j, k: (i, k)),
                      pl.BlockSpec((tk, tn), lambda i, j, k: (k, j))],
            out_specs=pl.BlockSpec((tm, tn), lambda i, j, k: (i, j)),
            scratch_shapes=[pltpu.VMEM((tm, tn), jnp.float32)]),
        compiler_params=pltpu.CompilerParams(
            dimension_semantics=("parallel", "parallel", "arbitrary"),
            vmem_limit_bytes=_VMEM_LIMIT),
    )(a, b)


def _tiled_matmul_bnstats(a, b, *, tm, tn, tk):
    mp, kp = a.shape
    _, np_ = b.shape
    gm, gn, gk = mp // tm, np_ // tn, kp // tk
    return pl.pallas_call(
        _up_gemm_stats_kernel,
        out_shape=(jax.ShapeDtypeStruct((mp, np_), jnp.bfloat16),
                   jax.ShapeDtypeStruct((gm, 2, np_), jnp.float32)),
        grid_spec=pltpu.PrefetchScalarGridSpec(
            num_scalar_prefetch=0,
            grid=(gm, gn, gk),
            in_specs=[pl.BlockSpec((tm, tk), lambda i, j, k: (i, k)),
                      pl.BlockSpec((tk, tn), lambda i, j, k: (k, j))],
            out_specs=[pl.BlockSpec((tm, tn), lambda i, j, k: (i, j)),
                       pl.BlockSpec((1, 2, tn), lambda i, j, k: (i, 0, j))],
            scratch_shapes=[pltpu.VMEM((tm, tn), jnp.float32)]),
        compiler_params=pltpu.CompilerParams(
            dimension_semantics=("parallel", "parallel", "arbitrary"),
            vmem_limit_bytes=_VMEM_LIMIT),
    )(a, b)


def _tiled_bn_apply(y, scale, shift, *, tm, tn):
    mp, np_ = y.shape
    grid = (mp // tm, np_ // tn)
    return pl.pallas_call(
        _bn_apply_kernel,
        out_shape=jax.ShapeDtypeStruct((mp, np_), jnp.bfloat16),
        grid_spec=pltpu.PrefetchScalarGridSpec(
            num_scalar_prefetch=0,
            grid=grid,
            in_specs=[pl.BlockSpec((tm, tn), lambda i, j: (i, j)),
                      pl.BlockSpec((1, tn), lambda i, j: (0, j)),
                      pl.BlockSpec((1, tn), lambda i, j: (0, j))],
            out_specs=pl.BlockSpec((tm, tn), lambda i, j: (i, j))),
        compiler_params=pltpu.CompilerParams(
            dimension_semantics=("parallel", "parallel"),
            vmem_limit_bytes=_VMEM_LIMIT),
    )(y, scale, shift)


# ------------------------------ JAX glue --------------------------------------

def _im2col(x, k, stride):
    """x: NCHW -> (N*Ho*Wo, C*k*k) patch matrix, columns ordered (C, kh, kw)
    to match PyTorch conv-weight flattening."""
    N, C, H, W = x.shape
    Ho = (H - k) // stride + 1
    Wo = (W - k) // stride + 1
    cols = []
    for kh in range(k):
        for kw in range(k):
            cols.append(x[:, :,
                          kh: kh + stride * (Ho - 1) + 1: stride,
                          kw: kw + stride * (Wo - 1) + 1: stride])
    cols = jnp.stack(cols, axis=2)                 # (N, C, k*k, Ho, Wo)
    cols = cols.transpose(0, 3, 4, 1, 2)           # (N, Ho, Wo, C, k*k)
    return cols.reshape(N * Ho * Wo, C * k * k), (Ho, Wo)


def unet_innermost_forward(x, params, *, k=4, stride=2, eps=1e-5,
                           tm_max=512, tk_max=512, tn_max=2048):
    """x: (N, input_nc, H, W) f32 -> (N, input_nc + outer_nc, H, W) f32."""
    assert k == 4 and stride == 2, "phase decomposition below assumes k=4, s=2"
    w_down, w_up, gamma, beta = params
    inner_nc = w_down.shape[0]
    outer_nc = w_up.shape[1]
    N, Cin, H, W = x.shape

    # ---- down path: Conv2d(4, 2, 0, bias=False) as a tiled bf16 im2col GEMM;
    #      LeakyReLU(0.2) is fused into the GEMM (applied per A tile) -----------
    xb = x.astype(jnp.bfloat16)
    patches, (Ho, Wo) = _im2col(xb, k, stride)                     # (M1, Cin*16)
    M1, K1 = patches.shape
    wd = w_down.reshape(inner_nc, K1).T.astype(jnp.bfloat16)       # (K1, inner)

    (M1p, K1p, N1p), (tm1, tk1, tn1) = _pick_tiles(
        M1, K1, inner_nc, tm_max=tm_max, tk_max=tk_max, tn_max=tn_max)
    h = _tiled_matmul_leakyrelu(_pad_2d(patches, M1p, K1p),
                                _pad_2d(wd, K1p, N1p),
                                tm=tm1, tn=tn1, tk=tk1)   # (M1p, N1p) bf16, ReLU'd
    h = h[:M1, :inner_nc].reshape(N, Ho, Wo, inner_nc)    # NHWC

    # ---- up path: ConvTranspose2d(4, 2, 0, bias=False) by phase decomposition:
    # out[co, 2q+ph, 2r+pw] = sum_{ci,dh,dw} h[ci, q-dh, r-dw] * Wup[ci,co,ph+2dh,pw+2dw]
    Hq, Wq = Ho + 1, Wo + 1
    Ho2, Wo2 = 2 * Hq, 2 * Wq                                      # == (Ho-1)*2 + 4
    hp = jnp.pad(h, ((0, 0), (1, 1), (1, 1), (0, 0)))              # zero halo
    taps = [hp[:, 1 - dh: 1 - dh + Hq, 1 - dw: 1 - dw + Wq, :]
            for dh in (0, 1) for dw in (0, 1)]                     # (N, Hq, Wq, inner)
    patches2 = jnp.stack(taps, axis=3).reshape(N * Hq * Wq, 4 * inner_nc)

    # weight: (ci, co, kh, kw) -> [(dh,dw,ci), (ph,pw,co)] with kh=ph+2dh, kw=pw+2dw
    w2 = w_up.transpose(2, 3, 0, 1).reshape(2, 2, 2, 2, inner_nc, outer_nc)
    w2 = w2.transpose(0, 2, 4, 1, 3, 5).reshape(4 * inner_nc, 4 * outer_nc)
    w2 = w2.astype(jnp.bfloat16)

    M2, K2 = patches2.shape
    C2 = 4 * outer_nc
    (M2p, K2p, N2p), (tm2, tk2, tn2) = _pick_tiles(
        M2, K2, C2, tm_max=tm_max, tk_max=tk_max, tn_max=tn_max)
    y2, stats = _tiled_matmul_bnstats(_pad_2d(patches2, M2p, K2p),
                                      _pad_2d(w2, K2p, N2p),
                                      tm=tm2, tn=tn2, tk=tk2)

    # ---- BatchNorm2d (training-mode batch stats, affine) -----------------------
    # per-column sums come from the GEMM's f32 accumulator; fold the 4 phase
    # columns of each channel and normalize by the TRUE element count
    # (zero-padded rows/cols contribute nothing).
    count = N * Ho2 * Wo2
    s = stats.sum(axis=0)                                           # (2, N2p) f32
    s1 = s[0, :C2].reshape(4, outer_nc).sum(axis=0)
    s2 = s[1, :C2].reshape(4, outer_nc).sum(axis=0)
    mean = s1 / count
    var = jnp.maximum(s2 / count - mean * mean, 0.0)                # biased variance
    scale_c = gamma * lax.rsqrt(var + eps)
    shift_c = beta - mean * scale_c
    scale = jnp.pad(jnp.tile(scale_c, 4), (0, N2p - C2)).reshape(1, N2p)
    shift = jnp.pad(jnp.tile(shift_c, 4), (0, N2p - C2)).reshape(1, N2p)

    ybn = _tiled_bn_apply(y2, scale, shift, tm=tm2, tn=tn2)         # bf16

    # depth-to-space: rows (n,q,r) x cols (ph,pw,co)  ->  NCHW
    y = ybn[:M2, :C2].reshape(N, Hq, Wq, 2, 2, outer_nc)
    y = y.transpose(0, 1, 3, 2, 4, 5).reshape(N, Ho2, Wo2, outer_nc)
    y = y.transpose(0, 3, 1, 2).astype(jnp.float32)

    # skip connection: cat([x, model(x)], dim=1)
    return jnp.concatenate([x, y], axis=1)


# --------------------- pure-JAX reference (module semantics) -------------------

def _reference(x, params, k=4, stride=2, eps=1e-5, bf16=False):
    """lax.conv-based reference.  bf16=True mirrors the kernel's operand / storage
    precision (f32 accumulation, bf16 intermediates); bf16=False is the exact
    module math."""
    w_down, w_up, gamma, beta = params
    gemm_dtype = jnp.bfloat16 if bf16 else jnp.float32
    x0 = x.astype(jnp.bfloat16).astype(jnp.float32) if bf16 else x
    xa = jnp.where(x0 >= 0, x0, 0.2 * x0).astype(gemm_dtype)
    h = lax.conv_general_dilated(
        xa, w_down.astype(gemm_dtype), window_strides=(stride, stride),
        padding="VALID", dimension_numbers=("NCHW", "OIHW", "NCHW"),
        preferred_element_type=jnp.float32)
    hr = jnp.maximum(h, 0.0).astype(gemm_dtype)
    w_eq = jnp.flip(w_up, axis=(2, 3)).transpose(1, 0, 2, 3).astype(gemm_dtype)
    y = lax.conv_general_dilated(
        hr, w_eq, window_strides=(1, 1),
        padding=[(k - 1, k - 1), (k - 1, k - 1)], lhs_dilation=(stride, stride),
        dimension_numbers=("NCHW", "OIHW", "NCHW"),
        preferred_element_type=jnp.float32)
    mean = jnp.mean(y, axis=(0, 2, 3), keepdims=True)
    var = jnp.mean((y - mean) ** 2, axis=(0, 2, 3), keepdims=True)
    scale = gamma[None, :, None, None] * lax.rsqrt(var + eps)
    shift = beta[None, :, None, None] - mean * scale
    yq = y.astype(jnp.bfloat16).astype(jnp.float32) if bf16 else y
    yn = yq * scale + shift
    if bf16:
        yn = yn.astype(jnp.bfloat16).astype(jnp.float32)
    return jnp.concatenate([x, yn], axis=1)


# ----------------------------------- main --------------------------------------

if __name__ == "__main__":
    key = jax.random.PRNGKey(0)
    k_x, k_wd, k_wu, k_g, k_b = jax.random.split(key, 5)

    N, H, W = 2, 16, 16
    outer_nc, inner_nc = 4, 8
    input_nc = outer_nc            # innermost block: input_nc defaults to outer_nc
    K = 4

    x = jax.random.normal(k_x, (N, input_nc, H, W), jnp.float32)
    # Conv2d weight (inner, input, k, k); ConvTranspose2d weight (inner, outer, k, k)
    w_down = 0.1 * jax.random.normal(k_wd, (inner_nc, input_nc, K, K), jnp.float32)
    w_up = 0.1 * jax.random.normal(k_wu, (inner_nc, outer_nc, K, K), jnp.float32)
    gamma = 1.0 + 0.1 * jax.random.normal(k_g, (outer_nc,), jnp.float32)
    beta = 0.1 * jax.random.normal(k_b, (outer_nc,), jnp.float32)
    params = (w_down, w_up, gamma, beta)

    fwd = jax.jit(unet_innermost_forward)
    out = jax.block_until_ready(fwd(x, params))

    assert out.shape == (N, input_nc + outer_nc, H, W), out.shape
    # check vs a reference using the same bf16 operand/storage precision
    ref_bf16 = _reference(x, params, bf16=True)
    assert jnp.allclose(out, ref_bf16, atol=2e-2, rtol=2e-2), \
        f"mismatch vs bf16-precision reference: {jnp.max(jnp.abs(out - ref_bf16))}"
    # loose sanity check vs the exact f32 module semantics
    ref_f32 = _reference(x, params, bf16=False)
    assert jnp.allclose(out, ref_f32, atol=1e-1, rtol=1e-1), \
        f"mismatch vs f32 reference: {jnp.max(jnp.abs(out - ref_f32))}"

    print("KERNEL_OK")
</pallas_src>

<mosaic_0001>
module attributes {stable_mosaic.version = 11 : i64} {
  func.func @_down_gemm_kernel(%arg0: i32, %arg1: i32, %arg2: i32, %arg3: memref<104x128xbf16, #tpu.memory_space<vmem>>, %arg4: memref<128x128xbf16, #tpu.memory_space<vmem>>, %arg5: memref<104x128xbf16, #tpu.memory_space<vmem>>, %arg6: memref<104x128xf32, #tpu.memory_space<vmem>>) attributes {dimension_semantics = [#tpu.dimension_semantics<parallel>, #tpu.dimension_semantics<parallel>, #tpu.dimension_semantics<arbitrary>], iteration_bounds = array<i64: 1, 1, 1>, scalar_prefetch = 0 : i64, scratch_operands = 1 : i64, tpu.core_type = #tpu.core_type<tc>, window_params = [{transform_indices = @transform_0, window_bounds = array<i64: 104, 128>}, {transform_indices = @transform_1, window_bounds = array<i64: 128, 128>}, {transform_indices = @transform_2, window_bounds = array<i64: 104, 128>}]} {
    %c0_i32 = arith.constant 0 : i32
    %0 = arith.cmpi eq, %arg2, %c0_i32 : i32
    %1 = arith.extui %0 : i1 to i32
    %c0_i32_0 = arith.constant 0 : i32
    %2 = arith.cmpi ne, %1, %c0_i32_0 : i32
    scf.if %2 {
      %cst_12 = arith.constant 0.000000e+00 : f32
      %19 = vector.broadcast %cst_12 : f32 to vector<104x128xf32>
      %c0_13 = arith.constant 0 : index
      %c0_14 = arith.constant 0 : index
      %20 = vector.load %arg6[%c0_13, %c0_14] : memref<104x128xf32, #tpu.memory_space<vmem>>, vector<104x128xf32>
      tpu.vector_store %arg6[%c0_13, %c0_14], %19 {strides = array<i32>} : memref<104x128xf32, #tpu.memory_space<vmem>>, vector<104x128xf32>,
    } else {
    }
    %c0 = arith.constant 0 : index
    %c0_1 = arith.constant 0 : index
    %3 = vector.load %arg3[%c0, %c0_1] : memref<104x128xbf16, #tpu.memory_space<vmem>>, vector<104x128xbf16>
    %4 = arith.extf %3 : vector<104x128xbf16> to vector<104x128xf32>
    %cst = arith.constant 0.000000e+00 : f32
    %5 = vector.broadcast %cst : f32 to vector<104x128xf32>
    %6 = arith.cmpf oge, %4, %5 : vector<104x128xf32>
    %cst_2 = arith.constant 2.000000e-01 : f32
    %7 = vector.broadcast %cst_2 : f32 to vector<104x128xf32>
    %8 = arith.mulf %7, %4 : vector<104x128xf32>
    %9 = arith.select %6, %4, %8 : vector<104x128xi1>, vector<104x128xf32>
    %10 = arith.truncf %9 : vector<104x128xf32> to vector<104x128xbf16>
    %c0_3 = arith.constant 0 : index
    %c0_4 = arith.constant 0 : index
    %11 = vector.load %arg6[%c0_3, %c0_4] : memref<104x128xf32, #tpu.memory_space<vmem>>, vector<104x128xf32>
    %c0_5 = arith.constant 0 : index
    %c0_6 = arith.constant 0 : index
    %12 = vector.load %arg4[%c0_5, %c0_6] : memref<128x128xbf16, #tpu.memory_space<vmem>>, vector<128x128xbf16>
    %cst_7 = arith.constant dense<0.000000e+00> : vector<104x128xf32>
    %13 = tpu.matmul %10, %12, %cst_7 {dimension_numbers = #tpu.dot_dimension_numbers<[1], [0], [0], [1], [0, 0, 1, 1], [], []>} : vector<104x128xbf16>, vector<128x128xbf16>, vector<104x128xf32> -> vector<104x128xf32>
    %14 = arith.addf %11, %13 : vector<104x128xf32>
    %c0_8 = arith.constant 0 : index
    %c0_9 = arith.constant 0 : index
    %15 = vector.load %arg6[%c0_8, %c0_9] : memref<104x128xf32, #tpu.memory_space<vmem>>, vector<104x128xf32>
    tpu.vector_store %arg6[%c0_8, %c0_9], %14 {strides = array<i32>} : memref<104x128xf32, #tpu.memory_space<vmem>>, vector<104x128xf32>,
    %c0_i32_10 = arith.constant 0 : i32
    %16 = arith.cmpi eq, %arg2, %c0_i32_10 : i32
    %17 = arith.extui %16 : i1 to i32
    %c0_i32_11 = arith.constant 0 : i32
    %18 = arith.cmpi ne, %17, %c0_i32_11 : i32
    scf.if %18 {
      %c0_12 = arith.constant 0 : index
      %c0_13 = arith.constant 0 : index
      %19 = vector.load %arg6[%c0_12, %c0_13] : memref<104x128xf32, #tpu.memory_space<vmem>>, vector<104x128xf32>
      %cst_14 = arith.constant 0.000000e+00 : f32
      %20 = vector.broadcast %cst_14 : f32 to vector<104x128xf32>
      %21 = arith.maximumf %19, %20 : vector<104x128xf32>
      %22 = arith.truncf %21 : vector<104x128xf32> to vector<104x128xbf16>
      %c0_15 = arith.constant 0 : index
      %c0_16 = arith.constant 0 : index
      %23 = vector.load %arg5[%c0_15, %c0_16] : memref<104x128xbf16, #tpu.memory_space<vmem>>, vector<104x128xbf16>
      tpu.vector_store %arg5[%c0_15, %c0_16], %22 {strides = array<i32>} : memref<104x128xbf16, #tpu.memory_space<vmem>>, vector<104x128xbf16>,
    } else {
    }
    return
  }
  func.func @transform_0(%arg0: i32, %arg1: i32, %arg2: i32) -> (i32, i32) {
    %c0_i32 = arith.constant 0 : i32
    return %arg0, %arg2 : i32, i32
  }
  func.func @transform_1(%arg0: i32, %arg1: i32, %arg2: i32) -> (i32, i32) {
    %c0_i32 = arith.constant 0 : i32
    return %arg2, %arg1 : i32, i32
  }
  func.func @transform_2(%arg0: i32, %arg1: i32, %arg2: i32) -> (i32, i32) {
    %c0_i32 = arith.constant 0 : i32
    return %arg0, %arg1 : i32, i32
  }
}

module attributes {stable_mosaic.version = 11 : i64} {
  func.func @_up_gemm_stats_kernel(%arg0: i32, %arg1: i32, %arg2: i32, %arg3: memref<128x128xbf16, #tpu.memory_space<vmem>>, %arg4: memref<128x128xbf16, #tpu.memory_space<vmem>>, %arg5: memref<128x128xbf16, #tpu.memory_space<vmem>>, %arg6: memref<1x2x128xf32, #tpu.memory_space<vmem>>, %arg7: memref<128x128xf32, #tpu.memory_space<vmem>>) attributes {dimension_semantics = [#tpu.dimension_semantics<parallel>, #tpu.dimension_semantics<parallel>, #tpu.dimension_semantics<arbitrary>], iteration_bounds = array<i64: 1, 1, 1>, scalar_prefetch = 0 : i64, scratch_operands = 1 : i64, tpu.core_type = #tpu.core_type<tc>, window_params = [{transform_indices = @transform_0, window_bounds = array<i64: 128, 128>}, {transform_indices = @transform_1, window_bounds = array<i64: 128, 128>}, {transform_indices = @transform_2, window_bounds = array<i64: 128, 128>}, {transform_indices = @transform_3, window_bounds = array<i64: 1, 2, 128>}]} {
    %c0_i32 = arith.constant 0 : i32
    %0 = arith.cmpi eq, %arg2, %c0_i32 : i32
    %1 = arith.extui %0 : i1 to i32
    %c0_i32_0 = arith.constant 0 : i32
    %2 = arith.cmpi ne, %1, %c0_i32_0 : i32
    scf.if %2 {
      %cst_10 = arith.constant 0.000000e+00 : f32
      %12 = vector.broadcast %cst_10 : f32 to vector<128x128xf32>
      %c0_11 = arith.constant 0 : index
      %c0_12 = arith.constant 0 : index
      %13 = vector.load %arg7[%c0_11, %c0_12] : memref<128x128xf32, #tpu.memory_space<vmem>>, vector<128x128xf32>
      tpu.vector_store %arg7[%c0_11, %c0_12], %12 {strides = array<i32>} : memref<128x128xf32, #tpu.memory_space<vmem>>, vector<128x128xf32>,
    } else {
    }
    %c0 = arith.constant 0 : index
    %c0_1 = arith.constant 0 : index
    %3 = vector.load %arg7[%c0, %c0_1] : memref<128x128xf32, #tpu.memory_space<vmem>>, vector<128x128xf32>
    %c0_2 = arith.constant 0 : index
    %c0_3 = arith.constant 0 : index
    %4 = vector.load %arg3[%c0_2, %c0_3] : memref<128x128xbf16, #tpu.memory_space<vmem>>, vector<128x128xbf16>
    %c0_4 = arith.constant 0 : index
    %c0_5 = arith.constant 0 : index
    %5 = vector.load %arg4[%c0_4, %c0_5] : memref<128x128xbf16, #tpu.memory_space<vmem>>, vector<128x128xbf16>
    %cst = arith.constant dense<0.000000e+00> : vector<128x128xf32>
    %6 = tpu.matmul %4, %5, %cst {dimension_numbers = #tpu.dot_dimension_numbers<[1], [0], [0], [1], [0, 0, 1, 1], [], []>} : vector<128x128xbf16>, vector<128x128xbf16>, vector<128x128xf32> -> vector<128x128xf32>
    %7 = arith.addf %3, %6 : vector<128x128xf32>
    %c0_6 = arith.constant 0 : index
    %c0_7 = arith.constant 0 : index
    %8 = vector.load %arg7[%c0_6, %c0_7] : memref<128x128xf32, #tpu.memory_space<vmem>>, vector<128x128xf32>
    tpu.vector_store %arg7[%c0_6, %c0_7], %7 {strides = array<i32>} : memref<128x128xf32, #tpu.memory_space<vmem>>, vector<128x128xf32>,
    %c0_i32_8 = arith.constant 0 : i32
    %9 = arith.cmpi eq, %arg2, %c0_i32_8 : i32
    %10 = arith.extui %9 : i1 to i32
    %c0_i32_9 = arith.constant 0 : i32
    %11 = arith.cmpi ne, %10, %c0_i32_9 : i32
    scf.if %11 {
      %c0_10 = arith.constant 0 : index
      %c0_11 = arith.constant 0 : index
      %12 = vector.load %arg7[%c0_10, %c0_11] : memref<128x128xf32, #tpu.memory_space<vmem>>, vector<128x128xf32>
      %13 = arith.truncf %12 : vector<128x128xf32> to vector<128x128xbf16>
      %c0_12 = arith.constant 0 : index
      %c0_13 = arith.constant 0 : index
      %14 = vector.load %arg5[%c0_12, %c0_13] : memref<128x128xbf16, #tpu.memory_space<vmem>>, vector<128x128xbf16>
      tpu.vector_store %arg5[%c0_12, %c0_13], %13 {strides = array<i32>} : memref<128x128xbf16, #tpu.memory_space<vmem>>, vector<128x128xbf16>,
      %cst_14 = arith.constant dense<0.000000e+00> : vector<128xf32>
      %15 = vector.multi_reduction <add>, %12, %cst_14 [0] : vector<128x128xf32> to vector<128xf32>
      %16 = vector.shape_cast %15 : vector<128xf32> to vector<1x128xf32>
      %17 = arith.mulf %12, %12 : vector<128x128xf32>
      %cst_15 = arith.constant dense<0.000000e+00> : vector<128xf32>
      %18 = vector.multi_reduction <add>, %17, %cst_15 [0] : vector<128x128xf32> to vector<128xf32>
      %19 = vector.shape_cast %18 : vector<128xf32> to vector<1x128xf32>
      %20 = tpu.concatenate %16, %19 in 0 : vector<1x128xf32>, vector<1x128xf32> -> vector<2x128xf32>
      %21 = vector.shape_cast %20 : vector<2x128xf32> to vector<1x2x128xf32>
      %c0_16 = arith.constant 0 : index
      %c0_17 = arith.constant 0 : index
      %c0_18 = arith.constant 0 : index
      %22 = vector.load %arg6[%c0_16, %c0_17, %c0_18] : memref<1x2x128xf32, #tpu.memory_space<vmem>>, vector<1x2x128xf32>
      tpu.vector_store %arg6[%c0_16, %c0_17, %c0_18], %21 {strides = array<i32>} : memref<1x2x128xf32, #tpu.memory_space<vmem>>, vector<1x2x128xf32>,
    } else {
    }
    return
  }
  func.func @transform_0(%arg0: i32, %arg1: i32, %arg2: i32) -> (i32, i32) {
    %c0_i32 = arith.constant 0 : i32
    return %arg0, %arg2 : i32, i32
  }
  func.func @transform_1(%arg0: i32, %arg1: i32, %arg2: i32) -> (i32, i32) {
    %c0_i32 = arith.constant 0 : i32
    return %arg2, %arg1 : i32, i32
  }
  func.func @transform_2(%arg0: i32, %arg1: i32, %arg2: i32) -> (i32, i32) {
    %c0_i32 = arith.constant 0 : i32
    return %arg0, %arg1 : i32, i32
  }
  func.func @transform_3(%arg0: i32, %arg1: i32, %arg2: i32) -> (i32, i32, i32) {
    %c0_i32 = arith.constant 0 : i32
    %c0_i32_0 = arith.constant 0 : i32
    return %arg0, %c0_i32, %arg1 : i32, i32, i32
  }
}

module attributes {stable_mosaic.version = 11 : i64} {
  func.func @_bn_apply_kernel(%arg0: i32, %arg1: i32, %arg2: memref<128x128xbf16, #tpu.memory_space<vmem>>, %arg3: memref<1x128xf32, #tpu.memory_space<vmem>>, %arg4: memref<1x128xf32, #tpu.memory_space<vmem>>, %arg5: memref<128x128xbf16, #tpu.memory_space<vmem>>) attributes {dimension_semantics = [#tpu.dimension_semantics<parallel>, #tpu.dimension_semantics<parallel>], iteration_bounds = array<i64: 1, 1>, scalar_prefetch = 0 : i64, scratch_operands = 0 : i64, tpu.core_type = #tpu.core_type<tc>, window_params = [{transform_indices = @transform_0, window_bounds = array<i64: 128, 128>}, {transform_indices = @transform_1, window_bounds = array<i64: 1, 128>}, {transform_indices = @transform_2, window_bounds = array<i64: 1, 128>}, {transform_indices = @transform_3, window_bounds = array<i64: 128, 128>}]} {
    %c0 = arith.constant 0 : index
    %c0_0 = arith.constant 0 : index
    %0 = vector.load %arg2[%c0, %c0_0] : memref<128x128xbf16, #tpu.memory_space<vmem>>, vector<128x128xbf16>
    %1 = arith.extf %0 : vector<128x128xbf16> to vector<128x128xf32>
    %c0_1 = arith.constant 0 : index
    %c0_2 = arith.constant 0 : index
    %2 = vector.load %arg3[%c0_1, %c0_2] : memref<1x128xf32, #tpu.memory_space<vmem>>, vector<1x128xf32>
    %3 = vector.broadcast %2 : vector<1x128xf32> to vector<128x128xf32>
    %4 = arith.mulf %1, %3 : vector<128x128xf32>
    %c0_3 = arith.constant 0 : index
    %c0_4 = arith.constant 0 : index
    %5 = vector.load %arg4[%c0_3, %c0_4] : memref<1x128xf32, #tpu.memory_space<vmem>>, vector<1x128xf32>
    %6 = vector.broadcast %5 : vector<1x128xf32> to vector<128x128xf32>
    %7 = arith.addf %4, %6 : vector<128x128xf32>
    %8 = arith.truncf %7 : vector<128x128xf32> to vector<128x128xbf16>
    %c0_5 = arith.constant 0 : index
    %c0_6 = arith.constant 0 : index
    %9 = vector.load %arg5[%c0_5, %c0_6] : memref<128x128xbf16, #tpu.memory_space<vmem>>, vector<128x128xbf16>
    tpu.vector_store %arg5[%c0_5, %c0_6], %8 {strides = array<i32>} : memref<128x128xbf16, #tpu.memory_space<vmem>>, vector<128x128xbf16>,
    return
  }
  func.func @transform_0(%arg0: i32, %arg1: i32) -> (i32, i32) {
    %c0_i32 = arith.constant 0 : i32
    return %arg0, %arg1 : i32, i32
  }
  func.func @transform_1(%arg0: i32, %arg1: i32) -> (i32, i32) {
    %c0_i32 = arith.constant 0 : i32
    %c0_i32_0 = arith.constant 0 : i32
    return %c0_i32, %arg1 : i32, i32
  }
  func.func @transform_2(%arg0: i32, %arg1: i32) -> (i32, i32) {
    %c0_i32 = arith.constant 0 : i32
    %c0_i32_0 = arith.constant 0 : i32
    return %c0_i32, %arg1 : i32, i32
  }
  func.func @transform_3(%arg0: i32, %arg1: i32) -> (i32, i32) {
    %c0_i32 = arith.constant 0 : i32
    return %arg0, %arg1 : i32, i32
  }
}

</mosaic_0001>

<llo_original>
// kernel: unet_innermost_forward.3
$region0: #{unet_innermost_forward.3}
  #allocation0 [shape = 'u32[]', space=smem, size = 0x4, offset = 0x4, fixed_abs, tag = 'smem constant byte address 0x4 - core index']
  #allocation1 [shape = 'u32[144,128]{1,0:T(1,128)}', space=vmem, size = 0x12000, scoped, tag = 'internal scratch']
  #allocation2 [shape = 'f32[104,128]{1,0:T(8,128)}', space=vmem, size = 0xd000, scoped, tag = 'scratch operand']
  %s0 = inlined_call_operand.vmem [shape: bf16[104,128], index: 0, kind: input, shape index: {}]
  %s1 = inlined_call_operand.vmem [shape: bf16[128,128], index: 1, kind: input, shape index: {}]
  %s2 = inlined_call_operand.vmem [shape: bf16[104,128], index: 2, kind: output, shape index: {}]
  %s3 = sld [smem:[#allocation0]]
  $region26: #{unet_innermost_forward.3} parent=0
    _
  %s5 = ssub.s32 1, %s3
  %s6 = scalar_select 0, %s5, %s3
  // Predicated region
  $region2: #{unet_innermost_forward.3} parent=0 // pred_check
    _
  $region3: #{unet_innermost_forward.3} parent=0 // pred_check_branch
    %8 = sbr.rel (0) target = $region5
  $region4: #{unet_innermost_forward.3} parent=0 // pred_region
    _
  $region5: #{unet_innermost_forward.3} parent=0 // pred_fallthru
    _
  // Predicated region
  $region6: #{unet_innermost_forward.3} parent=0 // pred_check
    _
  $region7: #{unet_innermost_forward.3} parent=0 // pred_check_branch
    %10 = sbr.rel (0) target = $region9
  $region8: #{unet_innermost_forward.3} parent=0 // pred_region
    _
  $region9: #{unet_innermost_forward.3} parent=0 // pred_fallthru
    _
  %p12 = scmp.eq.s32.totalorder 0, 0
  // Predicated region
  $region10: #{unet_innermost_forward.3} parent=0 // pred_check
    %p13 = pneg %p12
  $region11: #{unet_innermost_forward.3} parent=0 // pred_check_branch
    %15 = sbr.rel (%p13) target = $region13
  $region12: #{unet_innermost_forward.3} parent=0 // pred_region
    %16 = vst [vmem:[#allocation2] sm:$0xff] 0.0
    %17 = vst [vmem:[#allocation2 + $0x8] sm:$0xff] 0.0
    %18 = vst [vmem:[#allocation2 + $0x10] sm:$0xff] 0.0
    %19 = vst [vmem:[#allocation2 + $0x18] sm:$0xff] 0.0
    %20 = vst [vmem:[#allocation2 + $0x20] sm:$0xff] 0.0
    %21 = vst [vmem:[#allocation2 + $0x28] sm:$0xff] 0.0
    %22 = vst [vmem:[#allocation2 + $0x30] sm:$0xff] 0.0
    %23 = vst [vmem:[#allocation2 + $0x38] sm:$0xff] 0.0
    %24 = vst [vmem:[#allocation2 + $0x40] sm:$0xff] 0.0
    %25 = vst [vmem:[#allocation2 + $0x48] sm:$0xff] 0.0
    %26 = vst [vmem:[#allocation2 + $0x50] sm:$0xff] 0.0
    %27 = vst [vmem:[#allocation2 + $0x58] sm:$0xff] 0.0
    %28 = vst [vmem:[#allocation2 + $0x60] sm:$0xff] 0.0
  $region13: #{unet_innermost_forward.3} parent=0 // pred_fallthru
    _
  %v29 = vld [vmem:[%s0] sm:$0xf]
  %v30 = vld [vmem:[%s0 + $0x4] sm:$0xf]
  %v31 = vld [vmem:[%s0 + $0x8] sm:$0xf]
  %v32 = vld [vmem:[%s0 + $0xc] sm:$0xf]
  %v33 = vld [vmem:[%s0 + $0x10] sm:$0xf]
  %v34 = vld [vmem:[%s0 + $0x14] sm:$0xf]
  %v35 = vld [vmem:[%s0 + $0x18] sm:$0xf]
  %v36 = vld [vmem:[%s0 + $0x1c] sm:$0xf]
  %v37 = vld [vmem:[%s0 + $0x20] sm:$0xf]
  %v38 = vld [vmem:[%s0 + $0x24] sm:$0xf]
  %v39 = vld [vmem:[%s0 + $0x28] sm:$0xf]
  %v40 = vld [vmem:[%s0 + $0x2c] sm:$0xf]
  %v41 = vld [vmem:[%s0 + $0x30] sm:$0xf]
  %v42 = vunpack.c.l.bf16 %v29
  %v43 = vunpack.c.l.bf16 %v30
  %v44 = vunpack.c.l.bf16 %v31
  %v45 = vunpack.c.l.bf16 %v32
  %v46 = vunpack.c.l.bf16 %v33
  %v47 = vunpack.c.l.bf16 %v34
  %v48 = vunpack.c.l.bf16 %v35
  %v49 = vunpack.c.l.bf16 %v36
  %v50 = vunpack.c.l.bf16 %v37
  %v51 = vunpack.c.l.bf16 %v38
  %v52 = vunpack.c.l.bf16 %v39
  %v53 = vunpack.c.l.bf16 %v40
  %v54 = vunpack.c.l.bf16 %v41
  %vm55 = vcmp.ge.f32.partialorder %v42, 0.0
  %vm56 = vcmp.ge.f32.partialorder %v43, 0.0
  %vm57 = vcmp.ge.f32.partialorder %v44, 0.0
  %vm58 = vcmp.ge.f32.partialorder %v45, 0.0
  %vm59 = vcmp.ge.f32.partialorder %v46, 0.0
  %vm60 = vcmp.ge.f32.partialorder %v47, 0.0
  %vm61 = vcmp.ge.f32.partialorder %v48, 0.0
  %vm62 = vcmp.ge.f32.partialorder %v49, 0.0
  %vm63 = vcmp.ge.f32.partialorder %v50, 0.0
  %vm64 = vcmp.ge.f32.partialorder %v51, 0.0
  %vm65 = vcmp.ge.f32.partialorder %v52, 0.0
  %vm66 = vcmp.ge.f32.partialorder %v53, 0.0
  %vm67 = vcmp.ge.f32.partialorder %v54, 0.0
  %v68 = vmul.f32 %v42, 0.2
  %v69 = vmul.f32 %v43, 0.2
  %v70 = vmul.f32 %v44, 0.2
  %v71 = vmul.f32 %v45, 0.2
  %v72 = vmul.f32 %v46, 0.2
  %v73 = vmul.f32 %v47, 0.2
  %v74 = vmul.f32 %v48, 0.2
  %v75 = vmul.f32 %v49, 0.2
  %v76 = vmul.f32 %v50, 0.2
  %v77 = vmul.f32 %v51, 0.2
  %v78 = vmul.f32 %v52, 0.2
  %v79 = vmul.f32 %v53, 0.2
  %v80 = vmul.f32 %v54, 0.2
  %v81 = vsel %vm55, %v42, %v68
  %v82 = vsel %vm56, %v43, %v69
  %v83 = vsel %vm57, %v44, %v70
  %v84 = vsel %vm58, %v45, %v71
  %v85 = vsel %vm59, %v46, %v72
  %v86 = vsel %vm60, %v47, %v73
  %v87 = vsel %vm61, %v48, %v74
  %v88 = vsel %vm62, %v49, %v75
  %v89 = vsel %vm63, %v50, %v76
  %v90 = vsel %vm64, %v51, %v77
  %v91 = vsel %vm65, %v52, %v78
  %v92 = vsel %vm66, %v53, %v79
  %v93 = vsel %vm67, %v54, %v80
  %v94 = vpack.c.bf16 %v82, %v81
  %v95 = vpack.c.bf16 %v84, %v83
  %v96 = vpack.c.bf16 %v86, %v85
  %v97 = vpack.c.bf16 %v88, %v87
  %v98 = vpack.c.bf16 %v90, %v89
  %v99 = vpack.c.bf16 %v92, %v91
  %v100 = vpack.c.bf16 %v93, %v93
  %v101 = vld [vmem:[#allocation2] sm:$0xff]
  %v102 = vld [vmem:[#allocation2 + $0x8] sm:$0xff]
  %v103 = vld [vmem:[#allocation2 + $0x10] sm:$0xff]
  %v104 = vld [vmem:[#allocation2 + $0x18] sm:$0xff]
  %v105 = vld [vmem:[#allocation2 + $0x20] sm:$0xff]
  %v106 = vld [vmem:[#allocation2 + $0x28] sm:$0xff]
  %v107 = vld [vmem:[#allocation2 + $0x30] sm:$0xff]
  %v108 = vld [vmem:[#allocation2 + $0x38] sm:$0xff]
  %v109 = vld [vmem:[#allocation2 + $0x40] sm:$0xff]
  %v110 = vld [vmem:[#allocation2 + $0x48] sm:$0xff]
  %v111 = vld [vmem:[#allocation2 + $0x50] sm:$0xff]
  %v112 = vld [vmem:[#allocation2 + $0x58] sm:$0xff]
  %v113 = vld [vmem:[#allocation2 + $0x60] sm:$0xff]
  %v114 = vld [vmem:[%s1] sm:$0xf]
  %v115 = vld [vmem:[%s1 + $0x4] sm:$0xf]
  %v116 = vld [vmem:[%s1 + $0x8] sm:$0xf]
  %v117 = vld [vmem:[%s1 + $0xc] sm:$0xf]
  %v118 = vld [vmem:[%s1 + $0x10] sm:$0xf]
  %v119 = vld [vmem:[%s1 + $0x14] sm:$0xf]
  %v120 = vld [vmem:[%s1 + $0x18] sm:$0xf]
  %v121 = vld [vmem:[%s1 + $0x1c] sm:$0xf]
  %v122 = vld [vmem:[%s1 + $0x20] sm:$0xf]
  %v123 = vld [vmem:[%s1 + $0x24] sm:$0xf]
  %v124 = vld [vmem:[%s1 + $0x28] sm:$0xf]
  %v125 = vld [vmem:[%s1 + $0x2c] sm:$0xf]
  %v126 = vld [vmem:[%s1 + $0x30] sm:$0xf]
  %v127 = vld [vmem:[%s1 + $0x34] sm:$0xf]
  %v128 = vld [vmem:[%s1 + $0x38] sm:$0xf]
  %v129 = vld [vmem:[%s1 + $0x3c] sm:$0xf]
  %v146 = vunpack.c.l.b16 %v114
  %v147 = vunpack.c.l.b16 %v115
  %v148 = vunpack.c.l.b16 %v116
  %v149 = vunpack.c.l.b16 %v117
  %v150 = vunpack.c.l.b16 %v118
  %v151 = vunpack.c.l.b16 %v119
  %v152 = vunpack.c.l.b16 %v120
  %v153 = vunpack.c.l.b16 %v121
  %v154 = vunpack.c.l.b16 %v122
  %v155 = vunpack.c.l.b16 %v123
  %v156 = vunpack.c.l.b16 %v124
  %v157 = vunpack.c.l.b16 %v125
  %v158 = vunpack.c.l.b16 %v126
  %v159 = vunpack.c.l.b16 %v127
  %v160 = vunpack.c.l.b16 %v128
  %v161 = vunpack.c.l.b16 %v129
  %v162 = vpack.c.b16 %v147, %v146
  %v163 = vpack.c.b16 %v149, %v148
  %v164 = vpack.c.b16 %v151, %v150
  %v165 = vpack.c.b16 %v153, %v152
  %v166 = vpack.c.b16 %v155, %v154
  %v167 = vpack.c.b16 %v157, %v156
  %v168 = vpack.c.b16 %v159, %v158
  %v169 = vpack.c.b16 %v161, %v160
  %178 = vmatprep.subr.bf16.mxu0 0
  %179 = vmatpush1.bf16.msra.mxu0 %v169
  %180 = vmatprep.subr.bf16.mxu0 0
  %181 = vmatpush1.bf16.msra.mxu0 %v168
  %182 = vmatprep.subr.bf16.mxu0 0
  %183 = vmatpush1.bf16.msra.mxu0 %v167
  %184 = vmatprep.subr.bf16.mxu0 0
  %185 = vmatpush1.bf16.msra.mxu0 %v166
  %186 = vmatprep.subr.bf16.mxu0 0
  %187 = vmatpush1.bf16.msra.mxu0 %v165
  %188 = vmatprep.subr.bf16.mxu0 0
  %189 = vmatpush1.bf16.msra.mxu0 %v164
  %190 = vmatprep.subr.bf16.mxu0 0
  %191 = vmatpush1.bf16.msra.mxu0 %v163
  %192 = vmatprep.subr.bf16.mxu0 0
  %193 = vmatpush1.bf16.msra.mxu0 %v162
  %194 = vmatprep.subr.bf16.mxu0 0
  %195 = vmatpush2.bf16.msra.mxu0 0
  %196 = vmatprep.subr.bf16.mxu0 0
  %197 = vmatpush2.bf16.msra.mxu0 0
  %198 = vmatprep.subr.bf16.mxu0 0
  %199 = vmatpush2.bf16.msra.mxu0 0
  %200 = vmatprep.subr.bf16.mxu0 0
  %201 = vmatpush2.bf16.msra.mxu0 0
  %202 = vmatprep.subr.bf16.mxu0 0
  %203 = vmatpush2.bf16.msra.mxu0 0
  %204 = vmatprep.subr.bf16.mxu0 0
  %205 = vmatpush2.bf16.msra.mxu0 0
  %206 = vmatprep.subr.bf16.mxu0 0
  %207 = vmatpush2.bf16.msra.mxu0 0
  %208 = vmatprep.subr.bf16.mxu0 0
  %209 = vmatpush2.bf16.msra.mxu0 0
  %210 = vmatprep.mubr.bf16.mxu0 0
  %211 = vmatmul.mubr.bf16.gmra.mxu0 %v94
  %v212 = vpop.f32.mrf.mxu0
  %v213 = vadd.f32 0.0, %v212
  %v214 = vpop.f32.mrf.mxu0
  %v215 = vpop.f32.mrf.mxu0
  %v216 = vadd.f32 0.0, %v215
  %v217 = vpop.f32.mrf.mxu0
  %218 = vmatprep.mubr.bf16.mxu0 0
  %219 = vmatmul.mubr.bf16.gmra.mxu0 %v95
  %v220 = vpop.f32.mrf.mxu0
  %v221 = vadd.f32 0.0, %v220
  %v222 = vpop.f32.mrf.mxu0
  %v223 = vpop.f32.mrf.mxu0
  %v224 = vadd.f32 0.0, %v223
  %v225 = vpop.f32.mrf.mxu0
  %226 = vmatprep.mubr.bf16.mxu0 0
  %227 = vmatmul.mubr.bf16.gmra.mxu0 %v96
  %v228 = vpop.f32.mrf.mxu0
  %v229 = vadd.f32 0.0, %v228
  %v230 = vpop.f32.mrf.mxu0
  %v231 = vpop.f32.mrf.mxu0
  %v232 = vadd.f32 0.0, %v231
  %v233 = vpop.f32.mrf.mxu0
  %234 = vmatprep.mubr.bf16.mxu0 0
  %235 = vmatmul.mubr.bf16.gmra.mxu0 %v97
  %v236 = vpop.f32.mrf.mxu0
  %v237 = vadd.f32 0.0, %v236
  %v238 = vpop.f32.mrf.mxu0
  %v239 = vpop.f32.mrf.mxu0
  %v240 = vadd.f32 0.0, %v239
  %v241 = vpop.f32.mrf.mxu0
  %242 = vmatprep.mubr.bf16.mxu0 0
  %243 = vmatmul.mubr.bf16.gmra.mxu0 %v98
  %v244 = vpop.f32.mrf.mxu0
  %v245 = vadd.f32 0.0, %v244
  %v246 = vpop.f32.mrf.mxu0
  %v247 = vpop.f32.mrf.mxu0
  %v248 = vadd.f32 0.0, %v247
  %v249 = vpop.f32.mrf.mxu0
  %250 = vmatprep.mubr.bf16.mxu0 0
  %251 = vmatmul.mubr.bf16.gmra.mxu0 %v99
  %v252 = vpop.f32.mrf.mxu0
  %v253 = vadd.f32 0.0, %v252
  %v254 = vpop.f32.mrf.mxu0
  %v255 = vpop.f32.mrf.mxu0
  %v256 = vadd.f32 0.0, %v255
  %v257 = vpop.f32.mrf.mxu0
  %258 = vmatprep.mubr.bf16.mxu0 0
  %259 = vmatmul.mubr.bf16.gmra.mxu0 %v100
  %v260 = vpop.f32.mrf.mxu0
  %v261 = vadd.f32 0.0, %v260
  %v262 = vpop.f32.mrf.mxu0
  %v263 = vpop.f32.mrf.mxu0
  %v264 = vpop.f32.mrf.mxu0
  %265 = vdwg.mxu0
  %v266 = vadd.f32 %v101, %v213
  %v267 = vadd.f32 %v102, %v216
  %v268 = vadd.f32 %v103, %v221
  %v269 = vadd.f32 %v104, %v224
  %v270 = vadd.f32 %v105, %v229
  %v271 = vadd.f32 %v106, %v232
  %v272 = vadd.f32 %v107, %v237
  %v273 = vadd.f32 %v108, %v240
  %v274 = vadd.f32 %v109, %v245
  %v275 = vadd.f32 %v110, %v248
  %v276 = vadd.f32 %v111, %v253
  %v277 = vadd.f32 %v112, %v256
  %v278 = vadd.f32 %v113, %v261
  %279 = vst [vmem:[#allocation2] sm:$0xff] %v266
  %280 = vst [vmem:[#allocation2 + $0x8] sm:$0xff] %v267
  %281 = vst [vmem:[#allocation2 + $0x10] sm:$0xff] %v268
  %282 = vst [vmem:[#allocation2 + $0x18] sm:$0xff] %v269
  %283 = vst [vmem:[#allocation2 + $0x20] sm:$0xff] %v270
  %284 = vst [vmem:[#allocation2 + $0x28] sm:$0xff] %v271
  %285 = vst [vmem:[#allocation2 + $0x30] sm:$0xff] %v272
  %286 = vst [vmem:[#allocation2 + $0x38] sm:$0xff] %v273
  %287 = vst [vmem:[#allocation2 + $0x40] sm:$0xff] %v274
  %288 = vst [vmem:[#allocation2 + $0x48] sm:$0xff] %v275
  %289 = vst [vmem:[#allocation2 + $0x50] sm:$0xff] %v276
  %290 = vst [vmem:[#allocation2 + $0x58] sm:$0xff] %v277
  %291 = vst [vmem:[#allocation2 + $0x60] sm:$0xff] %v278
  // Predicated region
  $region14: #{unet_innermost_forward.3} parent=0 // pred_check
    %p292 = pneg %p12
  $region15: #{unet_innermost_forward.3} parent=0 // pred_check_branch
    %294 = sbr.rel (%p292) target = $region17
  $region16: #{unet_innermost_forward.3} parent=0 // pred_region
    %v295 = vld [vmem:[#allocation2] sm:$0xff]
    %v296 = vld [vmem:[#allocation2 + $0x8] sm:$0xff]
    %v297 = vld [vmem:[#allocation2 + $0x10] sm:$0xff]
    %v298 = vld [vmem:[#allocation2 + $0x18] sm:$0xff]
    %v299 = vld [vmem:[#allocation2 + $0x20] sm:$0xff]
    %v300 = vld [vmem:[#allocation2 + $0x28] sm:$0xff]
    %v301 = vld [vmem:[#allocation2 + $0x30] sm:$0xff]
    %v302 = vld [vmem:[#allocation2 + $0x38] sm:$0xff]
    %v303 = vld [vmem:[#allocation2 + $0x40] sm:$0xff]
    %v304 = vld [vmem:[#allocation2 + $0x48] sm:$0xff]
    %v305 = vld [vmem:[#allocation2 + $0x50] sm:$0xff]
    %v306 = vld [vmem:[#allocation2 + $0x58] sm:$0xff]
    %v307 = vld [vmem:[#allocation2 + $0x60] sm:$0xff]
    %v308 = vmax.f32 %v295, 0.0
    %v309 = vmax.f32 %v296, 0.0
    %v310 = vmax.f32 %v297, 0.0
    %v311 = vmax.f32 %v298, 0.0
    %v312 = vmax.f32 %v299, 0.0
    %v313 = vmax.f32 %v300, 0.0
    %v314 = vmax.f32 %v301, 0.0
    %v315 = vmax.f32 %v302, 0.0
    %v316 = vmax.f32 %v303, 0.0
    %v317 = vmax.f32 %v304, 0.0
    %v318 = vmax.f32 %v305, 0.0
    %v319 = vmax.f32 %v306, 0.0
    %v320 = vmax.f32 %v307, 0.0
    %v321 = vpack.c.bf16 %v309, %v308
    %v322 = vpack.c.bf16 %v311, %v310
    %v323 = vpack.c.bf16 %v313, %v312
    %v324 = vpack.c.bf16 %v315, %v314
    %v325 = vpack.c.bf16 %v317, %v316
    %v326 = vpack.c.bf16 %v319, %v318
    %v327 = vpack.c.bf16 %v320, %v320
    %v335 = vunpack.c.l.b16 %v321
    %v336 = vunpack.c.h.b16 %v321
    %v337 = vunpack.c.l.b16 %v322
    %v338 = vunpack.c.h.b16 %v322
    %v339 = vunpack.c.l.b16 %v323
    %v340 = vunpack.c.h.b16 %v323
    %v341 = vunpack.c.l.b16 %v324
    %v342 = vunpack.c.h.b16 %v324
    %v343 = vunpack.c.l.b16 %v325
    %v344 = vunpack.c.h.b16 %v325
    %v345 = vunpack.c.l.b16 %v326
    %v346 = vunpack.c.h.b16 %v326
    %v347 = vunpack.c.l.b16 %v327
    %v348 = vpack.c.b16 %v335, %v335
    %v349 = vpack.c.b16 %v336, %v336
    %v350 = vpack.c.b16 %v337, %v337
    %v351 = vpack.c.b16 %v338, %v338
    %v352 = vpack.c.b16 %v339, %v339
    %v353 = vpack.c.b16 %v340, %v340
    %v354 = vpack.c.b16 %v341, %v341
    %v355 = vpack.c.b16 %v342, %v342
    %v356 = vpack.c.b16 %v343, %v343
    %v357 = vpack.c.b16 %v344, %v344
    %v358 = vpack.c.b16 %v345, %v345
    %v359 = vpack.c.b16 %v346, %v346
    %v360 = vpack.c.b16 %v347, %v347
    %374 = vst [vmem:[%s2] sm:$0xf] %v348
    %375 = vst [vmem:[%s2 + $0x4] sm:$0xf] %v349
    %376 = vst [vmem:[%s2 + $0x8] sm:$0xf] %v350
    %377 = vst [vmem:[%s2 + $0xc] sm:$0xf] %v351
    %378 = vst [vmem:[%s2 + $0x10] sm:$0xf] %v352
    %379 = vst [vmem:[%s2 + $0x14] sm:$0xf] %v353
    %380 = vst [vmem:[%s2 + $0x18] sm:$0xf] %v354
    %381 = vst [vmem:[%s2 + $0x1c] sm:$0xf] %v355
    %382 = vst [vmem:[%s2 + $0x20] sm:$0xf] %v356
    %383 = vst [vmem:[%s2 + $0x24] sm:$0xf] %v357
    %384 = vst [vmem:[%s2 + $0x28] sm:$0xf] %v358
    %385 = vst [vmem:[%s2 + $0x2c] sm:$0xf] %v359
    %386 = vst [vmem:[%s2 + $0x30] sm:$0xf] %v360
  $region17: #{unet_innermost_forward.3} parent=0 // pred_fallthru
    _
  // Predicated region
  $region18: #{unet_innermost_forward.3} parent=0 // pred_check
    _
  $region19: #{unet_innermost_forward.3} parent=0 // pred_check_branch
    %388 = sbr.rel (0) target = $region21
  $region20: #{unet_innermost_forward.3} parent=0 // pred_region
    _
  $region21: #{unet_innermost_forward.3} parent=0 // pred_fallthru
    _
  // Predicated region
  $region22: #{unet_innermost_forward.3} parent=0 // pred_check
    _
  $region23: #{unet_innermost_forward.3} parent=0 // pred_check_branch
    %390 = sbr.rel (0) target = $region25
  $region24: #{unet_innermost_forward.3} parent=0 // pred_region
    _
  $region25: #{unet_innermost_forward.3} parent=0 // pred_fallthru
    _

// kernel: squeeze.2
$region0: #{squeeze.2}
  %s0 = inlined_call_operand.vmem [shape: f32[16], index: 0, kind: input, shape index: {}]
  %s1 = inlined_call_operand.vmem [shape: f32[4,4], index: 1, kind: output, shape index: {}]
  $region1: #{squeeze.2} parent=0
    #allocation0 [shape = 'u8[4096]{0}', space=vmem, size = 0x1000, scoped, tag = 'scoped mem for output reshape']
    #allocation1 [shape = 'u8[4096]{0}', space=vmem, size = 0x1000, scoped, tag = 'scoped mem for input reshape']
    %s3 = sshll.u32 1, 1
    %s4 = ssub.s32 %s3, 1
    %v5 = vld [vmem:[%s0] sm:%s4]
    %6 = vst [vmem:[#allocation1] sm:%s4] %v5
    %v7 = vld [vmem:[#allocation1] sm:$0x1]
    %vm8 = vcmask 31744
    %9 = vst.msk [vmem:[#allocation0] sm:$0x1] %vm8, %v7
    %v10 = vld [vmem:[#allocation1] sm:$0x1]
    %11 = vrot.lane.b32.xlu0 %v10, 124
    %v12 = vpop.permute.xlu0 %11
    %vm13 = vcmask 31744
    %s14 = scalar_lea.vmem [#allocation0], 1
    %15 = vst.msk [vmem:[%s14] sm:$0x1] %vm13, %v12
    %v16 = vld [vmem:[#allocation1] sm:$0x1]
    %17 = vrot.lane.b32.xlu0 %v16, 120
    %v18 = vpop.permute.xlu0 %17
    %vm19 = vcmask 31744
    %s20 = scalar_lea.vmem [#allocation0], 2
    %21 = vst.msk [vmem:[%s20] sm:$0x1] %vm19, %v18
    %v22 = vld [vmem:[#allocation1] sm:$0x1]
    %23 = vrot.lane.b32.xlu0 %v22, 116
    %v24 = vpop.permute.xlu0 %23
    %vm25 = vcmask 31744
    %s26 = scalar_lea.vmem [#allocation0], 3
    %27 = vst.msk [vmem:[%s26] sm:$0x1] %vm25, %v24
    %s29 = sshll.u32 1, 4
    %s30 = ssub.s32 %s29, 1
    %v32 = vld [vmem:[#allocation0] sm:%s30]
    %s33 = sshll.u32 1, 4
    %s34 = ssub.s32 %s33, 1
    %35 = vst [vmem:[%s1] sm:%s34] %v32

// kernel: tile.13
$region0: #{tile.13}
  #allocation0 [shape = 's32[1]{0}', space=sflag, size = 0x4, scoped, tag = 'scoped memory for tile.13']
  %s0 = inlined_call_operand.vmem [shape: f32[4], index: 0, kind: input, shape index: {}]
  %s1 = inlined_call_operand.vmem [shape: f32[4,4], index: 1, kind: output, shape index: {}]
  // Predicated region
  $region2: #{tile.13} parent=0 // pred_check
    _
  $region3: #{tile.13} parent=0 // pred_check_branch
    %3 = sbr.rel (0) target = $region5
  $region4: #{tile.13} parent=0 // pred_region
    _
  $region5: #{tile.13} parent=0 // pred_fallthru
    _
  %v4 = vld [vmem:[%s0] ss:$0 sm:$0xff]
  %5 = vst [vmem:[%s1] sm:$0xf] %v4

// kernel: tile.14
$region0: #{tile.14}
  %s0 = inlined_call_operand.vmem [shape: f32[4,4], index: 0, kind: input, shape index: {}]
  %s1 = inlined_call_operand.vmem [shape: f32[16], index: 1, kind: output, shape index: {}]
  $region1: #{tile.14} parent=0
    #allocation0 [shape = 'u8[4096]{0}', space=vmem, size = 0x1000, scoped, tag = 'scoped mem for output reshape']
    #allocation1 [shape = 'u8[4096]{0}', space=vmem, size = 0x1000, scoped, tag = 'scoped mem for input reshape']
    %s3 = sshll.u32 1, 4
    %s4 = ssub.s32 %s3, 1
    %v5 = vld [vmem:[%s0] sm:%s4]
    %6 = vst [vmem:[#allocation1] sm:%s4] %v5
    %v7 = vld [vmem:[#allocation1] sm:$0x1]
    %vm8 = vcmask 31744
    %9 = vst.msk [vmem:[#allocation0] sm:$0x1] %vm8, %v7
    %s10 = scalar_lea.vmem [#allocation1], 3
    %v11 = vld [vmem:[%s10] sm:$0x1]
    %12 = vrot.lane.b32.xlu0 %v11, 12
    %v13 = vpop.permute.xlu0 %12
    %vm14 = vcmask 130144
    %15 = vst.msk [vmem:[#allocation0] sm:$0x1] %vm14, %v13
    %s16 = scalar_lea.vmem [#allocation1], 2
    %v17 = vld [vmem:[%s16] sm:$0x1]
    %18 = vrot.lane.b32.xlu0 %v17, 8
    %v19 = vpop.permute.xlu0 %18
    %vm20 = vcmask 97344
    %21 = vst.msk [vmem:[#allocation0] sm:$0x1] %vm20, %v19
    %s22 = scalar_lea.vmem [#allocation1], 1
    %v23 = vld [vmem:[%s22] sm:$0x1]
    %24 = vrot.lane.b32.xlu0 %v23, 4
    %v25 = vpop.permute.xlu0 %24
    %vm26 = vcmask 64544
    %27 = vst.msk [vmem:[#allocation0] sm:$0x1] %vm26, %v25
    %s29 = sshll.u32 1, 1
    %s30 = ssub.s32 %s29, 1
    %v32 = vld [vmem:[#allocation0] sm:%s30]
    %s33 = sshll.u32 1, 1
    %s34 = ssub.s32 %s33, 1
    %35 = vst [vmem:[%s1] sm:%s34] %v32

// kernel: unet_innermost_forward.5
$region0: #{unet_innermost_forward.5}
  #allocation0 [shape = 'u32[]', space=smem, size = 0x4, offset = 0x4, fixed_abs, tag = 'smem constant byte address 0x4 - core index']
  #allocation1 [shape = 'u32[144,128]{1,0:T(1,128)}', space=vmem, size = 0x12000, scoped, tag = 'internal scratch']
  %s0 = inlined_call_operand.vmem [shape: bf16[128,128], index: 0, kind: input, shape index: {}]
  %s1 = inlined_call_operand.vmem [shape: f32[1,128], index: 1, kind: input, shape index: {}]
  %s2 = inlined_call_operand.vmem [shape: f32[1,128], index: 2, kind: input, shape index: {}]
  %s3 = inlined_call_operand.vmem [shape: bf16[128,128], index: 3, kind: output, shape index: {}]
  %s4 = sld [smem:[#allocation0]]
  $region22: #{unet_innermost_forward.5} parent=0
    _
  %s6 = ssub.s32 1, %s4
  %s7 = scalar_select 0, %s6, %s4
  // Predicated region
  $region2: #{unet_innermost_forward.5} parent=0 // pred_check
    _
  $region3: #{unet_innermost_forward.5} parent=0 // pred_check_branch
    %9 = sbr.rel (0) target = $region5
  $region4: #{unet_innermost_forward.5} parent=0 // pred_region
    _
  $region5: #{unet_innermost_forward.5} parent=0 // pred_fallthru
    _
  // Predicated region
  $region6: #{unet_innermost_forward.5} parent=0 // pred_check
    _
  $region7: #{unet_innermost_forward.5} parent=0 // pred_check_branch
    %11 = sbr.rel (0) target = $region9
  $region8: #{unet_innermost_forward.5} parent=0 // pred_region
    _
  $region9: #{unet_innermost_forward.5} parent=0 // pred_fallthru
    _
  // Predicated region
  $region10: #{unet_innermost_forward.5} parent=0 // pred_check
    _
  $region11: #{unet_innermost_forward.5} parent=0 // pred_check_branch
    %13 = sbr.rel (0) target = $region13
  $region12: #{unet_innermost_forward.5} parent=0 // pred_region
    _
  $region13: #{unet_innermost_forward.5} parent=0 // pred_fallthru
    _
  %v14 = vld [vmem:[%s0] sm:$0xf]
  %v15 = vld [vmem:[%s0 + $0x4] sm:$0xf]
  %v16 = vld [vmem:[%s0 + $0x8] sm:$0xf]
  %v17 = vld [vmem:[%s0 + $0xc] sm:$0xf]
  %v18 = vld [vmem:[%s0 + $0x10] sm:$0xf]
  %v19 = vld [vmem:[%s0 + $0x14] sm:$0xf]
  %v20 = vld [vmem:[%s0 + $0x18] sm:$0xf]
  %v21 = vld [vmem:[%s0 + $0x1c] sm:$0xf]
  %v22 = vld [vmem:[%s0 + $0x20] sm:$0xf]
  %v23 = vld [vmem:[%s0 + $0x24] sm:$0xf]
  %v24 = vld [vmem:[%s0 + $0x28] sm:$0xf]
  %v25 = vld [vmem:[%s0 + $0x2c] sm:$0xf]
  %v26 = vld [vmem:[%s0 + $0x30] sm:$0xf]
  %v27 = vld [vmem:[%s0 + $0x34] sm:$0xf]
  %v28 = vld [vmem:[%s0 + $0x38] sm:$0xf]
  %v29 = vld [vmem:[%s0 + $0x3c] sm:$0xf]
  %v30 = vunpack.c.l.bf16 %v14
  %v31 = vunpack.c.l.bf16 %v15
  %v32 = vunpack.c.l.bf16 %v16
  %v33 = vunpack.c.l.bf16 %v17
  %v34 = vunpack.c.l.bf16 %v18
  %v35 = vunpack.c.l.bf16 %v19
  %v36 = vunpack.c.l.bf16 %v20
  %v37 = vunpack.c.l.bf16 %v21
  %v38 = vunpack.c.l.bf16 %v22
  %v39 = vunpack.c.l.bf16 %v23
  %v40 = vunpack.c.l.bf16 %v24
  %v41 = vunpack.c.l.bf16 %v25
  %v42 = vunpack.c.l.bf16 %v26
  %v43 = vunpack.c.l.bf16 %v27
  %v44 = vunpack.c.l.bf16 %v28
  %v45 = vunpack.c.l.bf16 %v29
  %v46 = vld [vmem:[%s1] sm:$0x1]
  %v48 = vlaneseq
  %v49 = vshrl.u32 %v48, 7
  %v50 = vsub.s32 0, %v49
  %v51 = vrot.slane %v46, %v50
  %v53 = vmul.f32 %v30, %v51
  %v54 = vmul.f32 %v31, %v51
  %v55 = vmul.f32 %v32, %v51
  %v56 = vmul.f32 %v33, %v51
  %v57 = vmul.f32 %v34, %v51
  %v58 = vmul.f32 %v35, %v51
  %v59 = vmul.f32 %v36, %v51
  %v60 = vmul.f32 %v37, %v51
  %v61 = vmul.f32 %v38, %v51
  %v62 = vmul.f32 %v39, %v51
  %v63 = vmul.f32 %v40, %v51
  %v64 = vmul.f32 %v41, %v51
  %v65 = vmul.f32 %v42, %v51
  %v66 = vmul.f32 %v43, %v51
  %v67 = vmul.f32 %v44, %v51
  %v68 = vmul.f32 %v45, %v51
  %v69 = vld [vmem:[%s2] sm:$0x1]
  %v71 = vlaneseq
  %v72 = vshrl.u32 %v71, 7
  %v73 = vsub.s32 0, %v72
  %v74 = vrot.slane %v69, %v73
  %v76 = vadd.f32 %v53, %v74
  %v77 = vadd.f32 %v54, %v74
  %v78 = vadd.f32 %v55, %v74
  %v79 = vadd.f32 %v56, %v74
  %v80 = vadd.f32 %v57, %v74
  %v81 = vadd.f32 %v58, %v74
  %v82 = vadd.f32 %v59, %v74
  %v83 = vadd.f32 %v60, %v74
  %v84 = vadd.f32 %v61, %v74
  %v85 = vadd.f32 %v62, %v74
  %v86 = vadd.f32 %v63, %v74
  %v87 = vadd.f32 %v64, %v74
  %v88 = vadd.f32 %v65, %v74
  %v89 = vadd.f32 %v66, %v74
  %v90 = vadd.f32 %v67, %v74
  %v91 = vadd.f32 %v68, %v74
  %v92 = vpack.c.bf16 %v77, %v76
  %v93 = vpack.c.bf16 %v79, %v78
  %v94 = vpack.c.bf16 %v81, %v80
  %v95 = vpack.c.bf16 %v83, %v82
  %v96 = vpack.c.bf16 %v85, %v84
  %v97 = vpack.c.bf16 %v87, %v86
  %v98 = vpack.c.bf16 %v89, %v88
  %v99 = vpack.c.bf16 %v91, %v90
  %v108 = vunpack.c.l.b16 %v92
  %v109 = vunpack.c.h.b16 %v92
  %v110 = vunpack.c.l.b16 %v93
  %v111 = vunpack.c.h.b16 %v93
  %v112 = vunpack.c.l.b16 %v94
  %v113 = vunpack.c.h.b16 %v94
  %v114 = vunpack.c.l.b16 %v95
  %v115 = vunpack.c.h.b16 %v95
  %v116 = vunpack.c.l.b16 %v96
  %v117 = vunpack.c.h.b16 %v96
  %v118 = vunpack.c.l.b16 %v97
  %v119 = vunpack.c.h.b16 %v97
  %v120 = vunpack.c.l.b16 %v98
  %v121 = vunpack.c.h.b16 %v98
  %v122 = vunpack.c.l.b16 %v99
  %v123 = vunpack.c.h.b16 %v99
  %v124 = vpack.c.b16 %v108, %v108
  %v125 = vpack.c.b16 %v109, %v109
  %v126 = vpack.c.b16 %v110, %v110
  %v127 = vpack.c.b16 %v111, %v111
  %v128 = vpack.c.b16 %v112, %v112
  %v129 = vpack.c.b16 %v113, %v113
  %v130 = vpack.c.b16 %v114, %v114
  %v131 = vpack.c.b16 %v115, %v115
  %v132 = vpack.c.b16 %v116, %v116
  %v133 = vpack.c.b16 %v117, %v117
  %v134 = vpack.c.b16 %v118, %v118
  %v135 = vpack.c.b16 %v119, %v119
  %v136 = vpack.c.b16 %v120, %v120
  %v137 = vpack.c.b16 %v121, %v121
  %v138 = vpack.c.b16 %v122, %v122
  %v139 = vpack.c.b16 %v123, %v123
  %156 = vst [vmem:[%s3] sm:$0xf] %v124
  %157 = vst [vmem:[%s3 + $0x4] sm:$0xf] %v125
  %158 = vst [vmem:[%s3 + $0x8] sm:$0xf] %v126
  %159 = vst [vmem:[%s3 + $0xc] sm:$0xf] %v127
  %160 = vst [vmem:[%s3 + $0x10] sm:$0xf] %v128
  %161 = vst [vmem:[%s3 + $0x14] sm:$0xf] %v129
  %162 = vst [vmem:[%s3 + $0x18] sm:$0xf] %v130
  %163 = vst [vmem:[%s3 + $0x1c] sm:$0xf] %v131
  %164 = vst [vmem:[%s3 + $0x20] sm:$0xf] %v132
  %165 = vst [vmem:[%s3 + $0x24] sm:$0xf] %v133
  %166 = vst [vmem:[%s3 + $0x28] sm:$0xf] %v134
  %167 = vst [vmem:[%s3 + $0x2c] sm:$0xf] %v135
  %168 = vst [vmem:[%s3 + $0x30] sm:$0xf] %v136
  %169 = vst [vmem:[%s3 + $0x34] sm:$0xf] %v137
  %170 = vst [vmem:[%s3 + $0x38] sm:$0xf] %v138
  %171 = vst [vmem:[%s3 + $0x3c] sm:$0xf] %v139
  // Predicated region
  $region14: #{unet_innermost_forward.5} parent=0 // pred_check
    _
  $region15: #{unet_innermost_forward.5} parent=0 // pred_check_branch
    %173 = sbr.rel (0) target = $region17
  $region16: #{unet_innermost_forward.5} parent=0 // pred_region
    _
  $region17: #{unet_innermost_forward.5} parent=0 // pred_fallthru
    _
  // Predicated region
  $region18: #{unet_innermost_forward.5} parent=0 // pred_check
    _
  $region19: #{unet_innermost_forward.5} parent=0 // pred_check_branch
    %175 = sbr.rel (0) target = $region21
  $region20: #{unet_innermost_forward.5} parent=0 // pred_region
    _
  $region21: #{unet_innermost_forward.5} parent=0 // pred_fallthru
    _

// kernel: unet_innermost_forward.4
$region0: #{unet_innermost_forward.4}
  #allocation0 [shape = 'u32[]', space=smem, size = 0x4, offset = 0x4, fixed_abs, tag = 'smem constant byte address 0x4 - core index']
  #allocation1 [shape = 'u32[144,128]{1,0:T(1,128)}', space=vmem, size = 0x12000, scoped, tag = 'internal scratch']
  #allocation2 [shape = 'f32[128,128]{1,0:T(8,128)}', space=vmem, size = 0x10000, scoped, tag = 'scratch operand']
  %s0 = inlined_call_operand.vmem [shape: bf16[128,128], index: 0, kind: input, shape index: {}]
  %s1 = inlined_call_operand.vmem [shape: bf16[128,128], index: 1, kind: input, shape index: {}]
  %s2 = inlined_call_operand.vmem [shape: bf16[128,128], index: 2, kind: output, shape index: {0}]
  %s3 = inlined_call_operand.vmem [shape: f32[1,2,128], index: 3, kind: output, shape index: {1}]
  %4 = xla_tuple %s2, %s3
  %s5 = sld [smem:[#allocation0]]
  $region34: #{unet_innermost_forward.4} parent=0
    _
  %s7 = ssub.s32 1, %s5
  %s8 = scalar_select 0, %s7, %s5
  // Predicated region
  $region2: #{unet_innermost_forward.4} parent=0 // pred_check
    _
  $region3: #{unet_innermost_forward.4} parent=0 // pred_check_branch
    %10 = sbr.rel (0) target = $region5
  $region4: #{unet_innermost_forward.4} parent=0 // pred_region
    _
  $region5: #{unet_innermost_forward.4} parent=0 // pred_fallthru
    _
  // Predicated region
  $region6: #{unet_innermost_forward.4} parent=0 // pred_check
    _
  $region7: #{unet_innermost_forward.4} parent=0 // pred_check_branch
    %12 = sbr.rel (0) target = $region9
  $region8: #{unet_innermost_forward.4} parent=0 // pred_region
    _
  $region9: #{unet_innermost_forward.4} parent=0 // pred_fallthru
    _
  %p14 = scmp.eq.s32.totalorder 0, 0
  // Predicated region
  $region10: #{unet_innermost_forward.4} parent=0 // pred_check
    %p15 = pneg %p14
  $region11: #{unet_innermost_forward.4} parent=0 // pred_check_branch
    %17 = sbr.rel (%p15) target = $region13
  $region12: #{unet_innermost_forward.4} parent=0 // pred_region
    %18 = vst [vmem:[#allocation2] sm:$0xff] 0.0
    %19 = vst [vmem:[#allocation2 + $0x8] sm:$0xff] 0.0
    %20 = vst [vmem:[#allocation2 + $0x10] sm:$0xff] 0.0
    %21 = vst [vmem:[#allocation2 + $0x18] sm:$0xff] 0.0
    %22 = vst [vmem:[#allocation2 + $0x20] sm:$0xff] 0.0
    %23 = vst [vmem:[#allocation2 + $0x28] sm:$0xff] 0.0
    %24 = vst [vmem:[#allocation2 + $0x30] sm:$0xff] 0.0
    %25 = vst [vmem:[#allocation2 + $0x38] sm:$0xff] 0.0
    %26 = vst [vmem:[#allocation2 + $0x40] sm:$0xff] 0.0
    %27 = vst [vmem:[#allocation2 + $0x48] sm:$0xff] 0.0
    %28 = vst [vmem:[#allocation2 + $0x50] sm:$0xff] 0.0
    %29 = vst [vmem:[#allocation2 + $0x58] sm:$0xff] 0.0
    %30 = vst [vmem:[#allocation2 + $0x60] sm:$0xff] 0.0
    %31 = vst [vmem:[#allocation2 + $0x68] sm:$0xff] 0.0
    %32 = vst [vmem:[#allocation2 + $0x70] sm:$0xff] 0.0
    %33 = vst [vmem:[#allocation2 + $0x78] sm:$0xff] 0.0
  $region13: #{unet_innermost_forward.4} parent=0 // pred_fallthru
    _
  %v34 = vld [vmem:[#allocation2] sm:$0xff]
  %v35 = vld [vmem:[#allocation2 + $0x8] sm:$0xff]
  %v36 = vld [vmem:[#allocation2 + $0x10] sm:$0xff]
  %v37 = vld [vmem:[#allocation2 + $0x18] sm:$0xff]
  %v38 = vld [vmem:[#allocation2 + $0x20] sm:$0xff]
  %v39 = vld [vmem:[#allocation2 + $0x28] sm:$0xff]
  %v40 = vld [vmem:[#allocation2 + $0x30] sm:$0xff]
  %v41 = vld [vmem:[#allocation2 + $0x38] sm:$0xff]
  %v42 = vld [vmem:[#allocation2 + $0x40] sm:$0xff]
  %v43 = vld [vmem:[#allocation2 + $0x48] sm:$0xff]
  %v44 = vld [vmem:[#allocation2 + $0x50] sm:$0xff]
  %v45 = vld [vmem:[#allocation2 + $0x58] sm:$0xff]
  %v46 = vld [vmem:[#allocation2 + $0x60] sm:$0xff]
  %v47 = vld [vmem:[#allocation2 + $0x68] sm:$0xff]
  %v48 = vld [vmem:[#allocation2 + $0x70] sm:$0xff]
  %v49 = vld [vmem:[#allocation2 + $0x78] sm:$0xff]
  %v50 = vld [vmem:[%s0] sm:$0xf]
  %v51 = vld [vmem:[%s0 + $0x4] sm:$0xf]
  %v52 = vld [vmem:[%s0 + $0x8] sm:$0xf]
  %v53 = vld [vmem:[%s0 + $0xc] sm:$0xf]
  %v54 = vld [vmem:[%s0 + $0x10] sm:$0xf]
  %v55 = vld [vmem:[%s0 + $0x14] sm:$0xf]
  %v56 = vld [vmem:[%s0 + $0x18] sm:$0xf]
  %v57 = vld [vmem:[%s0 + $0x1c] sm:$0xf]
  %v58 = vld [vmem:[%s0 + $0x20] sm:$0xf]
  %v59 = vld [vmem:[%s0 + $0x24] sm:$0xf]
  %v60 = vld [vmem:[%s0 + $0x28] sm:$0xf]
  %v61 = vld [vmem:[%s0 + $0x2c] sm:$0xf]
  %v62 = vld [vmem:[%s0 + $0x30] sm:$0xf]
  %v63 = vld [vmem:[%s0 + $0x34] sm:$0xf]
  %v64 = vld [vmem:[%s0 + $0x38] sm:$0xf]
  %v65 = vld [vmem:[%s0 + $0x3c] sm:$0xf]
  %v66 = vld [vmem:[%s1] sm:$0xf]
  %v67 = vld [vmem:[%s1 + $0x4] sm:$0xf]
  %v68 = vld [vmem:[%s1 + $0x8] sm:$0xf]
  %v69 = vld [vmem:[%s1 + $0xc] sm:$0xf]
  %v70 = vld [vmem:[%s1 + $0x10] sm:$0xf]
  %v71 = vld [vmem:[%s1 + $0x14] sm:$0xf]
  %v72 = vld [vmem:[%s1 + $0x18] sm:$0xf]
  %v73 = vld [vmem:[%s1 + $0x1c] sm:$0xf]
  %v74 = vld [vmem:[%s1 + $0x20] sm:$0xf]
  %v75 = vld [vmem:[%s1 + $0x24] sm:$0xf]
  %v76 = vld [vmem:[%s1 + $0x28] sm:$0xf]
  %v77 = vld [vmem:[%s1 + $0x2c] sm:$0xf]
  %v78 = vld [vmem:[%s1 + $0x30] sm:$0xf]
  %v79 = vld [vmem:[%s1 + $0x34] sm:$0xf]
  %v80 = vld [vmem:[%s1 + $0x38] sm:$0xf]
  %v81 = vld [vmem:[%s1 + $0x3c] sm:$0xf]
  %v98 = vunpack.c.l.b16 %v50
  %v99 = vunpack.c.l.b16 %v51
  %v100 = vunpack.c.l.b16 %v52
  %v101 = vunpack.c.l.b16 %v53
  %v102 = vunpack.c.l.b16 %v54
  %v103 = vunpack.c.l.b16 %v55
  %v104 = vunpack.c.l.b16 %v56
  %v105 = vunpack.c.l.b16 %v57
  %v106 = vunpack.c.l.b16 %v58
  %v107 = vunpack.c.l.b16 %v59
  %v108 = vunpack.c.l.b16 %v60
  %v109 = vunpack.c.l.b16 %v61
  %v110 = vunpack.c.l.b16 %v62
  %v111 = vunpack.c.l.b16 %v63
  %v112 = vunpack.c.l.b16 %v64
  %v113 = vunpack.c.l.b16 %v65
  %v114 = vpack.c.b16 %v99, %v98
  %v115 = vpack.c.b16 %v101, %v100
  %v116 = vpack.c.b16 %v103, %v102
  %v117 = vpack.c.b16 %v105, %v104
  %v118 = vpack.c.b16 %v107, %v106
  %v119 = vpack.c.b16 %v109, %v108
  %v120 = vpack.c.b16 %v111, %v110
  %v121 = vpack.c.b16 %v113, %v112
  %v146 = vunpack.c.l.b16 %v66
  %v147 = vunpack.c.l.b16 %v67
  %v148 = vunpack.c.l.b16 %v68
  %v149 = vunpack.c.l.b16 %v69
  %v150 = vunpack.c.l.b16 %v70
  %v151 = vunpack.c.l.b16 %v71
  %v152 = vunpack.c.l.b16 %v72
  %v153 = vunpack.c.l.b16 %v73
  %v154 = vunpack.c.l.b16 %v74
  %v155 = vunpack.c.l.b16 %v75
  %v156 = vunpack.c.l.b16 %v76
  %v157 = vunpack.c.l.b16 %v77
  %v158 = vunpack.c.l.b16 %v78
  %v159 = vunpack.c.l.b16 %v79
  %v160 = vunpack.c.l.b16 %v80
  %v161 = vunpack.c.l.b16 %v81
  %v162 = vpack.c.b16 %v147, %v146
  %v163 = vpack.c.b16 %v149, %v148
  %v164 = vpack.c.b16 %v151, %v150
  %v165 = vpack.c.b16 %v153, %v152
  %v166 = vpack.c.b16 %v155, %v154
  %v167 = vpack.c.b16 %v157, %v156
  %v168 = vpack.c.b16 %v159, %v158
  %v169 = vpack.c.b16 %v161, %v160
  %178 = vmatprep.subr.bf16.mxu0 0
  %179 = vmatpush1.bf16.msra.mxu0 %v169
  %180 = vmatprep.subr.bf16.mxu0 0
  %181 = vmatpush1.bf16.msra.mxu0 %v168
  %182 = vmatprep.subr.bf16.mxu0 0
  %183 = vmatpush1.bf16.msra.mxu0 %v167
  %184 = vmatprep.subr.bf16.mxu0 0
  %185 = vmatpush1.bf16.msra.mxu0 %v166
  %186 = vmatprep.subr.bf16.mxu0 0
  %187 = vmatpush1.bf16.msra.mxu0 %v165
  %188 = vmatprep.subr.bf16.mxu0 0
  %189 = vmatpush1.bf16.msra.mxu0 %v164
  %190 = vmatprep.subr.bf16.mxu0 0
  %191 = vmatpush1.bf16.msra.mxu0 %v163
  %192 = vmatprep.subr.bf16.mxu0 0
  %193 = vmatpush1.bf16.msra.mxu0 %v162
  %194 = vmatprep.subr.bf16.mxu0 0
  %195 = vmatpush2.bf16.msra.mxu0 0
  %196 = vmatprep.subr.bf16.mxu0 0
  %197 = vmatpush2.bf16.msra.mxu0 0
  %198 = vmatprep.subr.bf16.mxu0 0
  %199 = vmatpush2.bf16.msra.mxu0 0
  %200 = vmatprep.subr.bf16.mxu0 0
  %201 = vmatpush2.bf16.msra.mxu0 0
  %202 = vmatprep.subr.bf16.mxu0 0
  %203 = vmatpush2.bf16.msra.mxu0 0
  %204 = vmatprep.subr.bf16.mxu0 0
  %205 = vmatpush2.bf16.msra.mxu0 0
  %206 = vmatprep.subr.bf16.mxu0 0
  %207 = vmatpush2.bf16.msra.mxu0 0
  %208 = vmatprep.subr.bf16.mxu0 0
  %209 = vmatpush2.bf16.msra.mxu0 0
  %210 = vmatprep.mubr.bf16.mxu0 0
  %211 = vmatmul.mubr.bf16.gmra.mxu0 %v114
  %v212 = vpop.f32.mrf.mxu0
  %v213 = vadd.f32 0.0, %v212
  %v214 = vpop.f32.mrf.mxu0
  %v215 = vpop.f32.mrf.mxu0
  %v216 = vadd.f32 0.0, %v215
  %v217 = vpop.f32.mrf.mxu0
  %218 = vmatprep.mubr.bf16.mxu0 0
  %219 = vmatmul.mubr.bf16.gmra.mxu0 %v115
  %v220 = vpop.f32.mrf.mxu0
  %v221 = vadd.f32 0.0, %v220
  %v222 = vpop.f32.mrf.mxu0
  %v223 = vpop.f32.mrf.mxu0
  %v224 = vadd.f32 0.0, %v223
  %v225 = vpop.f32.mrf.mxu0
  %226 = vmatprep.mubr.bf16.mxu0 0
  %227 = vmatmul.mubr.bf16.gmra.mxu0 %v116
  %v228 = vpop.f32.mrf.mxu0
  %v229 = vadd.f32 0.0, %v228
  %v230 = vpop.f32.mrf.mxu0
  %v231 = vpop.f32.mrf.mxu0
  %v232 = vadd.f32 0.0, %v231
  %v233 = vpop.f32.mrf.mxu0
  %234 = vmatprep.mubr.bf16.mxu0 0
  %235 = vmatmul.mubr.bf16.gmra.mxu0 %v117
  %v236 = vpop.f32.mrf.mxu0
  %v237 = vadd.f32 0.0, %v236
  %v238 = vpop.f32.mrf.mxu0
  %v239 = vpop.f32.mrf.mxu0
  %v240 = vadd.f32 0.0, %v239
  %v241 = vpop.f32.mrf.mxu0
  %242 = vmatprep.mubr.bf16.mxu0 0
  %243 = vmatmul.mubr.bf16.gmra.mxu0 %v118
  %v244 = vpop.f32.mrf.mxu0
  %v245 = vadd.f32 0.0, %v244
  %v246 = vpop.f32.mrf.mxu0
  %v247 = vpop.f32.mrf.mxu0
  %v248 = vadd.f32 0.0, %v247
  %v249 = vpop.f32.mrf.mxu0
  %250 = vmatprep.mubr.bf16.mxu0 0
  %251 = vmatmul.mubr.bf16.gmra.mxu0 %v119
  %v252 = vpop.f32.mrf.mxu0
  %v253 = vadd.f32 0.0, %v252
  %v254 = vpop.f32.mrf.mxu0
  %v255 = vpop.f32.mrf.mxu0
  %v256 = vadd.f32 0.0, %v255
  %v257 = vpop.f32.mrf.mxu0
  %258 = vmatprep.mubr.bf16.mxu0 0
  %259 = vmatmul.mubr.bf16.gmra.mxu0 %v120
  %v260 = vpop.f32.mrf.mxu0
  %v261 = vadd.f32 0.0, %v260
  %v262 = vpop.f32.mrf.mxu0
  %v263 = vpop.f32.mrf.mxu0
  %v264 = vadd.f32 0.0, %v263
  %v265 = vpop.f32.mrf.mxu0
  %266 = vmatprep.mubr.bf16.mxu0 0
  %267 = vmatmul.mubr.bf16.gmra.mxu0 %v121
  %v268 = vpop.f32.mrf.mxu0
  %v269 = vadd.f32 0.0, %v268
  %v270 = vpop.f32.mrf.mxu0
  %v271 = vpop.f32.mrf.mxu0
  %v272 = vadd.f32 0.0, %v271
  %v273 = vpop.f32.mrf.mxu0
  %274 = vdwg.mxu0
  %v275 = vadd.f32 %v34, %v213
  %v276 = vadd.f32 %v35, %v216
  %v277 = vadd.f32 %v36, %v221
  %v278 = vadd.f32 %v37, %v224
  %v279 = vadd.f32 %v38, %v229
  %v280 = vadd.f32 %v39, %v232
  %v281 = vadd.f32 %v40, %v237
  %v282 = vadd.f32 %v41, %v240
  %v283 = vadd.f32 %v42, %v245
  %v284 = vadd.f32 %v43, %v248
  %v285 = vadd.f32 %v44, %v253
  %v286 = vadd.f32 %v45, %v256
  %v287 = vadd.f32 %v46, %v261
  %v288 = vadd.f32 %v47, %v264
  %v289 = vadd.f32 %v48, %v269
  %v290 = vadd.f32 %v49, %v272
  %291 = vst [vmem:[#allocation2] sm:$0xff] %v275
  %292 = vst [vmem:[#allocation2 + $0x8] sm:$0xff] %v276
  %293 = vst [vmem:[#allocation2 + $0x10] sm:$0xff] %v277
  %294 = vst [vmem:[#allocation2 + $0x18] sm:$0xff] %v278
  %295 = vst [vmem:[#allocation2 + $0x20] sm:$0xff] %v279
  %296 = vst [vmem:[#allocation2 + $0x28] sm:$0xff] %v280
  %297 = vst [vmem:[#allocation2 + $0x30] sm:$0xff] %v281
  %298 = vst [vmem:[#allocation2 + $0x38] sm:$0xff] %v282
  %299 = vst [vmem:[#allocation2 + $0x40] sm:$0xff] %v283
  %300 = vst [vmem:[#allocation2 + $0x48] sm:$0xff] %v284
  %301 = vst [vmem:[#allocation2 + $0x50] sm:$0xff] %v285
  %302 = vst [vmem:[#allocation2 + $0x58] sm:$0xff] %v286
  %303 = vst [vmem:[#allocation2 + $0x60] sm:$0xff] %v287
  %304 = vst [vmem:[#allocation2 + $0x68] sm:$0xff] %v288
  %305 = vst [vmem:[#allocation2 + $0x70] sm:$0xff] %v289
  %306 = vst [vmem:[#allocation2 + $0x78] sm:$0xff] %v290
  // Predicated region
  $region14: #{unet_innermost_forward.4} parent=0 // pred_check
    %p307 = pneg %p14
  $region15: #{unet_innermost_forward.4} parent=0 // pred_check_branch
    %309 = sbr.rel (%p307) target = $region17
  $region16: #{unet_innermost_forward.4} parent=0 // pred_region
    %v310 = vld [vmem:[#allocation2] sm:$0xff]
    %v311 = vld [vmem:[#allocation2 + $0x8] sm:$0xff]
    %v312 = vld [vmem:[#allocation2 + $0x10] sm:$0xff]
    %v313 = vld [vmem:[#allocation2 + $0x18] sm:$0xff]
    %v314 = vld [vmem:[#allocation2 + $0x20] sm:$0xff]
    %v315 = vld [vmem:[#allocation2 + $0x28] sm:$0xff]
    %v316 = vld [vmem:[#allocation2 + $0x30] sm:$0xff]
    %v317 = vld [vmem:[#allocation2 + $0x38] sm:$0xff]
    %v318 = vld [vmem:[#allocation2 + $0x40] sm:$0xff]
    %v319 = vld [vmem:[#allocation2 + $0x48] sm:$0xff]
    %v320 = vld [vmem:[#allocation2 + $0x50] sm:$0xff]
    %v321 = vld [vmem:[#allocation2 + $0x58] sm:$0xff]
    %v322 = vld [vmem:[#allocation2 + $0x60] sm:$0xff]
    %v323 = vld [vmem:[#allocation2 + $0x68] sm:$0xff]
    %v324 = vld [vmem:[#allocation2 + $0x70] sm:$0xff]
    %v325 = vld [vmem:[#allocation2 + $0x78] sm:$0xff]
    %v326 = vpack.c.bf16 %v311, %v310
    %v327 = vpack.c.bf16 %v313, %v312
    %v328 = vpack.c.bf16 %v315, %v314
    %v329 = vpack.c.bf16 %v317, %v316
    %v330 = vpack.c.bf16 %v319, %v318
    %v331 = vpack.c.bf16 %v321, %v320
    %v332 = vpack.c.bf16 %v323, %v322
    %v333 = vpack.c.bf16 %v325, %v324
    %v342 = vunpack.c.l.b16 %v326
    %v343 = vunpack.c.h.b16 %v326
    %v344 = vunpack.c.l.b16 %v327
    %v345 = vunpack.c.h.b16 %v327
    %v346 = vunpack.c.l.b16 %v328
    %v347 = vunpack.c.h.b16 %v328
    %v348 = vunpack.c.l.b16 %v329
    %v349 = vunpack.c.h.b16 %v329
    %v350 = vunpack.c.l.b16 %v330
    %v351 = vunpack.c.h.b16 %v330
    %v352 = vunpack.c.l.b16 %v331
    %v353 = vunpack.c.h.b16 %v331
    %v354 = vunpack.c.l.b16 %v332
    %v355 = vunpack.c.h.b16 %v332
    %v356 = vunpack.c.l.b16 %v333
    %v357 = vunpack.c.h.b16 %v333
    %v358 = vpack.c.b16 %v342, %v342
    %v359 = vpack.c.b16 %v343, %v343
    %v360 = vpack.c.b16 %v344, %v344
    %v361 = vpack.c.b16 %v345, %v345
    %v362 = vpack.c.b16 %v346, %v346
    %v363 = vpack.c.b16 %v347, %v347
    %v364 = vpack.c.b16 %v348, %v348
    %v365 = vpack.c.b16 %v349, %v349
    %v366 = vpack.c.b16 %v350, %v350
    %v367 = vpack.c.b16 %v351, %v351
    %v368 = vpack.c.b16 %v352, %v352
    %v369 = vpack.c.b16 %v353, %v353
    %v370 = vpack.c.b16 %v354, %v354
    %v371 = vpack.c.b16 %v355, %v355
    %v372 = vpack.c.b16 %v356, %v356
    %v373 = vpack.c.b16 %v357, %v357
    %390 = vst [vmem:[%s2] sm:$0xf] %v358
    %391 = vst [vmem:[%s2 + $0x4] sm:$0xf] %v359
    %392 = vst [vmem:[%s2 + $0x8] sm:$0xf] %v360
    %393 = vst [vmem:[%s2 + $0xc] sm:$0xf] %v361
    %394 = vst [vmem:[%s2 + $0x10] sm:$0xf] %v362
    %395 = vst [vmem:[%s2 + $0x14] sm:$0xf] %v363
    %396 = vst [vmem:[%s2 + $0x18] sm:$0xf] %v364
    %397 = vst [vmem:[%s2 + $0x1c] sm:$0xf] %v365
    %398 = vst [vmem:[%s2 + $0x20] sm:$0xf] %v366
    %399 = vst [vmem:[%s2 + $0x24] sm:$0xf] %v367
    %400 = vst [vmem:[%s2 + $0x28] sm:$0xf] %v368
    %401 = vst [vmem:[%s2 + $0x2c] sm:$0xf] %v369
    %402 = vst [vmem:[%s2 + $0x30] sm:$0xf] %v370
    %403 = vst [vmem:[%s2 + $0x34] sm:$0xf] %v371
    %404 = vst [vmem:[%s2 + $0x38] sm:$0xf] %v372
    %405 = vst [vmem:[%s2 + $0x3c] sm:$0xf] %v373
    %v406 = vadd.f32 %v310, %v311
    %v407 = vadd.f32 %v406, %v312
    %v408 = vadd.f32 %v407, %v313
    %v409 = vadd.f32 %v408, %v314
    %v410 = vadd.f32 %v409, %v315
    %v411 = vadd.f32 %v410, %v316
    %v412 = vadd.f32 %v411, %v317
    %v413 = vadd.f32 %v412, %v318
    %v414 = vadd.f32 %v413, %v319
    %v415 = vadd.f32 %v414, %v320
    %v416 = vadd.f32 %v415, %v321
    %v417 = vadd.f32 %v416, %v322
    %v418 = vadd.f32 %v417, %v323
    %v419 = vadd.f32 %v418, %v324
    %v420 = vadd.f32 %v419, %v325
    %v421 = vrot.slane %v420, 4
    %v422 = vadd.f32 %v420, %v421
    %v423 = vrot.slane %v422, 2
    %v424 = vadd.f32 %v422, %v423
    %v425 = vrot.slane %v424, 1
    %v426 = vadd.f32 %v424, %v425
    %v427 = vmul.f32 %v310, %v310
    %v428 = vmul.f32 %v311, %v311
    %v429 = vmul.f32 %v312, %v312
    %v430 = vmul.f32 %v313, %v313
    %v431 = vmul.f32 %v314, %v314
    %v432 = vmul.f32 %v315, %v315
    %v433 = vmul.f32 %v316, %v316
    %v434 = vmul.f32 %v317, %v317
    %v435 = vmul.f32 %v318, %v318
    %v436 = vmul.f32 %v319, %v319
    %v437 = vmul.f32 %v320, %v320
    %v438 = vmul.f32 %v321, %v321
    %v439 = vmul.f32 %v322, %v322
    %v440 = vmul.f32 %v323, %v323
    %v441 = vmul.f32 %v324, %v324
    %v442 = vmul.f32 %v325, %v325
    %v443 = vadd.f32 %v427, %v428
    %v444 = vadd.f32 %v443, %v429
    %v445 = vadd.f32 %v444, %v430
    %v446 = vadd.f32 %v445, %v431
    %v447 = vadd.f32 %v446, %v432
    %v448 = vadd.f32 %v447, %v433
    %v449 = vadd.f32 %v448, %v434
    %v450 = vadd.f32 %v449, %v435
    %v451 = vadd.f32 %v450, %v436
    %v452 = vadd.f32 %v451, %v437
    %v453 = vadd.f32 %v452, %v438
    %v454 = vadd.f32 %v453, %v439
    %v455 = vadd.f32 %v454, %v440
    %v456 = vadd.f32 %v455, %v441
    %v457 = vadd.f32 %v456, %v442
    %v458 = vrot.slane %v457, 4
    %v459 = vadd.f32 %v457, %v458
    %v460 = vrot.slane %v459, 2
    %v461 = vadd.f32 %v459, %v460
    %v462 = vrot.slane %v461, 1
    %v463 = vadd.f32 %v461, %v462
    %vm464 = vcmask 1040384
    %v465 = vsel %vm464, %v426, %v463
    %466 = vst [vmem:[%s3] sm:$0x3] %v465
  $region17: #{unet_innermost_forward.4} parent=0 // pred_fallthru
    _
  // Predicated region
  $region18: #{unet_innermost_forward.4} parent=0 // pred_check
    _
  $region19: #{unet_innermost_forward.4} parent=0 // pred_check_branch
    %468 = sbr.rel (0) target = $region21
  $region20: #{unet_innermost_forward.4} parent=0 // pred_region
    _
  $region21: #{unet_innermost_forward.4} parent=0 // pred_fallthru
    _
  // Predicated region
  $region22: #{unet_innermost_forward.4} parent=0 // pred_check
    _
  $region23: #{unet_innermost_forward.4} parent=0 // pred_check_branch
    %470 = sbr.rel (0) target = $region25
  $region24: #{unet_innermost_forward.4} parent=0 // pred_region
    _
  $region25: #{unet_innermost_forward.4} parent=0 // pred_fallthru
    _
  // Predicated region
  $region26: #{unet_innermost_forward.4} parent=0 // pred_check
    _
  $region27: #{unet_innermost_forward.4} parent=0 // pred_check_branch
    %472 = sbr.rel (0) target = $region29
  $region28: #{unet_innermost_forward.4} parent=0 // pred_region
    _
  $region29: #{unet_innermost_forward.4} parent=0 // pred_fallthru
    _
  // Predicated region
  $region30: #{unet_innermost_forward.4} parent=0 // pred_check
    _
  $region31: #{unet_innermost_forward.4} parent=0 // pred_check_branch
    %474 = sbr.rel (0) target = $region33
  $region32: #{unet_innermost_forward.4} parent=0 // pred_region
    _
  $region33: #{unet_innermost_forward.4} parent=0 // pred_fallthru
    _

</llo_original>
